<compile_context>
chip_gen: v6e
topology: v6e:2x2x1
jax: 0.10.0
libtpu: 0.0.40
codegen_flags: <defaults>
</compile_context>

<pallas_src>
import jax
import jax.numpy as jnp
from jax.experimental import pallas as pl
from jax.experimental.pallas import tpu as pltpu

HIDDEN = 16
EMBED_SIZE = 8
FEATURES_NUM = 16
NUM_CLASS = 2
BN_EPS = 1e-5
NUM_LAYERS = 5
SUBLANE = 8

_VMEM = pl.BlockSpec(memory_space=pltpu.MemorySpace.VMEM)


def _round_up(n, m):
    return ((n + m - 1) // m) * m


# ---------------------------------------------------------------------------
# Fused Pallas kernel: full forward pass
# ---------------------------------------------------------------------------
def _gin_fused_kernel(a_ref, x_ref, wfirst_ref, wstack_ref, vec_ref,
                      lin2w_ref, lin2b_ref, o_ref):
    """5x (GINConv -> ReLU -> BN) -> lin1 -> ReLU -> (dropout=id) -> lin2 -> log_softmax.

    wstack layout (10, H, H): [L1.w2, L2.w1, L2.w2, L3.w1, L3.w2,
                               L4.w1, L4.w2, L5.w1, L5.w2, lin1.w]
    vec layout (21, H):       [L{l}.b1, L{l}.b2, L{l}.scale, L{l}.shift]*5 + [lin1.b]
    """
    a = a_ref[...]            # (Np, Np) = A + I  (zero-padded)
    h = x_ref[...]            # (Np, F_in)

    for l in range(NUM_LAYERS):
        # GINConv (eps = 0): neighbor sum-aggregation + self term = (A + I) @ h
        agg = jnp.dot(a, h, preferred_element_type=jnp.float32)
        if l == 0:
            w1 = wfirst_ref[...]
            w2 = wstack_ref[0]
        else:
            w1 = wstack_ref[2 * l - 1]
            w2 = wstack_ref[2 * l]
        b1 = vec_ref[4 * l + 0:4 * l + 1, :]
        b2 = vec_ref[4 * l + 1:4 * l + 2, :]
        scale = vec_ref[4 * l + 2:4 * l + 3, :]
        shift = vec_ref[4 * l + 3:4 * l + 4, :]
        # nn = Linear -> ReLU -> Linear, then the outer F.relu(conv(x))
        t = jnp.maximum(jnp.dot(agg, w1, preferred_element_type=jnp.float32) + b1, 0.0)
        t = jnp.dot(t, w2, preferred_element_type=jnp.float32) + b2
        t = jnp.maximum(t, 0.0)
        # BatchNorm1d (eval mode), affine pre-folded on host
        h = t * scale + shift

    # MLP head
    lin1_w = wstack_ref[2 * NUM_LAYERS - 1]
    lin1_b = vec_ref[4 * NUM_LAYERS:4 * NUM_LAYERS + 1, :]
    t = jnp.maximum(jnp.dot(h, lin1_w, preferred_element_type=jnp.float32) + lin1_b, 0.0)
    # dropout(p=0.25) is identity in eval mode
    logits = jnp.dot(t, lin2w_ref[...], preferred_element_type=jnp.float32) + lin2b_ref[...]
    m = jnp.max(logits, axis=-1, keepdims=True)
    s = logits - m
    lse = jnp.log(jnp.sum(jnp.exp(s), axis=-1, keepdims=True))
    o_ref[...] = s - lse


def gin_fused(a_hat, x, wfirst, wstack, vec, lin2_w, lin2_b):
    n = x.shape[0]
    return pl.pallas_call(
        _gin_fused_kernel,
        out_shape=jax.ShapeDtypeStruct((n, NUM_CLASS), jnp.float32),
        in_specs=[_VMEM] * 7,
        out_specs=_VMEM,
    )(a_hat, x, wfirst, wstack, vec, lin2_w, lin2_b)


# ---------------------------------------------------------------------------
# Parameter construction (deterministic, synthetic) + host-side packing
# ---------------------------------------------------------------------------
def init_params(key, categories_nums, features_num=FEATURES_NUM,
                hidden=HIDDEN, num_class=NUM_CLASS, embed_size=EMBED_SIZE):
    params = {}
    keys = iter(jax.random.split(key, 64))

    def nrm(shape, scale=0.1):
        return scale * jax.random.normal(next(keys), shape, dtype=jnp.float32)

    params["embeddings"] = [nrm((m, embed_size), 1.0) for m in categories_nums]

    in_dim = embed_size * len(categories_nums) + features_num
    layers = []
    dims = [in_dim] + [hidden] * NUM_LAYERS
    for li in range(NUM_LAYERS):
        w1 = nrm((dims[li], hidden))          # stored (in, out) -> x @ w1
        b1 = nrm((1, hidden))
        w2 = nrm((hidden, hidden))
        b2 = nrm((1, hidden))
        gamma = 1.0 + nrm((1, hidden))
        beta = nrm((1, hidden))
        mean = nrm((1, hidden))
        var = 1.0 + jnp.abs(nrm((1, hidden)))
        layers.append((w1, b1, w2, b2, gamma, beta, mean, var))
    params["layers"] = layers

    params["lin1_w"] = nrm((hidden, hidden))
    params["lin1_b"] = nrm((1, hidden))
    params["lin2_w"] = nrm((hidden, num_class))
    params["lin2_b"] = nrm((1, num_class))
    return params


def pack_params(params):
    """Fold BN into (scale, shift) and pack weights/vectors into contiguous slabs."""
    layers = params["layers"]
    wfirst = layers[0][0]                                  # (in_dim, H)

    mats = [layers[0][2]]                                  # L1.w2
    for l in range(1, NUM_LAYERS):
        mats.append(layers[l][0])                          # Ll.w1
        mats.append(layers[l][2])                          # Ll.w2
    mats.append(params["lin1_w"])                          # lin1.w
    wstack = jnp.stack(mats, axis=0)                       # (10, H, H)

    vecs = []
    for (w1, b1, w2, b2, gamma, beta, mean, var) in layers:
        scale = gamma * jax.lax.rsqrt(var + BN_EPS)
        shift = beta - mean * scale
        vecs += [b1, b2, scale, shift]
    vecs.append(params["lin1_b"])
    vec = jnp.concatenate(vecs, axis=0)                    # (21, H)

    return wfirst, wstack, vec, params["lin2_w"], params["lin2_b"]


# ---------------------------------------------------------------------------
# Full forward pass (embedding lookup / adjacency build are JAX glue)
# ---------------------------------------------------------------------------
def gin_forward(params, x_feat, categories_value, edge_index, num_nodes):
    # embedding lookups and feature concat (glue, stays in XLA)
    embs = [jnp.take(tbl, categories_value[:, i], axis=0)
            for i, tbl in enumerate(params["embeddings"])]
    x = jnp.concatenate([x_feat] + embs, axis=1).astype(jnp.float32)

    # dense A_hat = A + I;  A[dst, src] += 1  (PyG message flow src -> dst)
    src, dst = edge_index[0], edge_index[1]
    A = jnp.zeros((num_nodes, num_nodes), jnp.float32).at[dst, src].add(1.0)
    a_hat = A + jnp.eye(num_nodes, dtype=jnp.float32)

    # pad node dim to a multiple of 8 (sublane); padded rows/cols are zero so
    # they never influence real nodes, and their outputs are sliced off below.
    n_pad = _round_up(num_nodes, SUBLANE)
    if n_pad != num_nodes:
        pad = n_pad - num_nodes
        a_hat = jnp.pad(a_hat, ((0, pad), (0, pad)))
        x = jnp.pad(x, ((0, pad), (0, 0)))

    wfirst, wstack, vec, lin2_w, lin2_b = pack_params(params)
    out = gin_fused(a_hat, x, wfirst, wstack, vec, lin2_w, lin2_b)
    return out[:num_nodes]


# ---------------------------------------------------------------------------
# Pure-JAX reference (unfolded BN, for correctness check)
# ---------------------------------------------------------------------------
def gin_forward_ref(params, x_feat, categories_value, edge_index, num_nodes):
    embs = [jnp.take(tbl, categories_value[:, i], axis=0)
            for i, tbl in enumerate(params["embeddings"])]
    x = jnp.concatenate([x_feat] + embs, axis=1).astype(jnp.float32)
    src, dst = edge_index[0], edge_index[1]
    A = jnp.zeros((num_nodes, num_nodes), jnp.float32).at[dst, src].add(1.0)
    a_hat = A + jnp.eye(num_nodes, dtype=jnp.float32)

    h = x
    for (w1, b1, w2, b2, gamma, beta, mean, var) in params["layers"]:
        agg = a_hat @ h
        t = jnp.maximum(agg @ w1 + b1, 0.0) @ w2 + b2
        t = jnp.maximum(t, 0.0)
        h = (t - mean) * jax.lax.rsqrt(var + BN_EPS) * gamma + beta
    t = jnp.maximum(h @ params["lin1_w"] + params["lin1_b"], 0.0)
    logits = t @ params["lin2_w"] + params["lin2_b"]
    return jax.nn.log_softmax(logits, axis=-1)


# ---------------------------------------------------------------------------
if __name__ == "__main__":
    key = jax.random.PRNGKey(0)
    k_param, k_x, k_cat, k_src, k_dst = jax.random.split(key, 5)

    categories_nums = [6, 10, 4]          # three categorical features
    num_nodes = 32
    num_edges = 64

    params = init_params(k_param, categories_nums)

    x_feat = jax.random.normal(k_x, (num_nodes, FEATURES_NUM), dtype=jnp.float32)
    categories_value = jnp.stack(
        [jax.random.randint(jax.random.fold_in(k_cat, i), (num_nodes,), 0, m)
         for i, m in enumerate(categories_nums)], axis=1).astype(jnp.int32)
    edge_index = jnp.stack([
        jax.random.randint(k_src, (num_edges,), 0, num_nodes),
        jax.random.randint(k_dst, (num_edges,), 0, num_nodes),
    ], axis=0).astype(jnp.int32)

    out = gin_forward(params, x_feat, categories_value, edge_index, num_nodes)
    out = jax.block_until_ready(out)

    ref = gin_forward_ref(params, x_feat, categories_value, edge_index, num_nodes)
    assert out.shape == (num_nodes, NUM_CLASS)
    assert jnp.allclose(out, ref, atol=1e-4, rtol=1e-4), "mismatch vs reference"

    print("KERNEL_OK")
</pallas_src>

<mosaic_0001>
module attributes {stable_mosaic.version = 11 : i64} {
  func.func @_gin_fused_kernel(%arg0: memref<32x32xf32, #tpu.memory_space<vmem>>, %arg1: memref<32x40xf32, #tpu.memory_space<vmem>>, %arg2: memref<40x16xf32, #tpu.memory_space<vmem>>, %arg3: memref<10x16x16xf32, #tpu.memory_space<vmem>>, %arg4: memref<21x16xf32, #tpu.memory_space<vmem>>, %arg5: memref<16x2xf32, #tpu.memory_space<vmem>>, %arg6: memref<1x2xf32, #tpu.memory_space<vmem>>, %arg7: memref<32x2xf32, #tpu.memory_space<vmem>>) attributes {dimension_semantics = [], scalar_prefetch = 0 : i64, scratch_operands = 0 : i64, tpu.core_type = #tpu.core_type<tc>} {
    %c0 = arith.constant 0 : index
    %c0_0 = arith.constant 0 : index
    %0 = vector.load %arg0[%c0, %c0_0] : memref<32x32xf32, #tpu.memory_space<vmem>>, vector<32x32xf32>
    %c0_1 = arith.constant 0 : index
    %c0_2 = arith.constant 0 : index
    %1 = vector.load %arg1[%c0_1, %c0_2] : memref<32x40xf32, #tpu.memory_space<vmem>>, vector<32x40xf32>
    %cst = arith.constant dense<0.000000e+00> : vector<32x40xf32>
    %2 = tpu.matmul %0, %1, %cst {dimension_numbers = #tpu.dot_dimension_numbers<[1], [0], [0], [1], [0, 0, 1, 1], [], []>} : vector<32x32xf32>, vector<32x40xf32>, vector<32x40xf32> -> vector<32x40xf32>
    %c0_3 = arith.constant 0 : index
    %c0_4 = arith.constant 0 : index
    %3 = vector.load %arg2[%c0_3, %c0_4] : memref<40x16xf32, #tpu.memory_space<vmem>>, vector<40x16xf32>
    %c0_5 = arith.constant 0 : index
    %c0_6 = arith.constant 0 : index
    %c0_7 = arith.constant 0 : index
    %4 = vector.load %arg3[%c0_5, %c0_6, %c0_7] : memref<10x16x16xf32, #tpu.memory_space<vmem>>, vector<1x16x16xf32>
    %5 = vector.shape_cast %4 : vector<1x16x16xf32> to vector<16x16xf32>
    %c0_8 = arith.constant 0 : index
    %c0_9 = arith.constant 0 : index
    %6 = vector.load %arg4[%c0_8, %c0_9] : memref<21x16xf32, #tpu.memory_space<vmem>>, vector<1x16xf32>
    %c1 = arith.constant 1 : index
    %c0_10 = arith.constant 0 : index
    %7 = vector.load %arg4[%c1, %c0_10] : memref<21x16xf32, #tpu.memory_space<vmem>>, vector<1x16xf32>
    %c2 = arith.constant 2 : index
    %c0_11 = arith.constant 0 : index
    %8 = vector.load %arg4[%c2, %c0_11] : memref<21x16xf32, #tpu.memory_space<vmem>>, vector<1x16xf32>
    %c3 = arith.constant 3 : index
    %c0_12 = arith.constant 0 : index
    %9 = vector.load %arg4[%c3, %c0_12] : memref<21x16xf32, #tpu.memory_space<vmem>>, vector<1x16xf32>
    %cst_13 = arith.constant dense<0.000000e+00> : vector<32x16xf32>
    %10 = tpu.matmul %2, %3, %cst_13 {dimension_numbers = #tpu.dot_dimension_numbers<[1], [0], [0], [1], [0, 0, 1, 1], [], []>} : vector<32x40xf32>, vector<40x16xf32>, vector<32x16xf32> -> vector<32x16xf32>
    %11 = vector.broadcast %6 : vector<1x16xf32> to vector<32x16xf32>
    %12 = arith.addf %10, %11 : vector<32x16xf32>
    %cst_14 = arith.constant 0.000000e+00 : f32
    %13 = vector.broadcast %cst_14 : f32 to vector<32x16xf32>
    %14 = arith.maximumf %12, %13 : vector<32x16xf32>
    %cst_15 = arith.constant dense<0.000000e+00> : vector<32x16xf32>
    %15 = tpu.matmul %14, %5, %cst_15 {dimension_numbers = #tpu.dot_dimension_numbers<[1], [0], [0], [1], [0, 0, 1, 1], [], []>} : vector<32x16xf32>, vector<16x16xf32>, vector<32x16xf32> -> vector<32x16xf32>
    %16 = vector.broadcast %7 : vector<1x16xf32> to vector<32x16xf32>
    %17 = arith.addf %15, %16 : vector<32x16xf32>
    %cst_16 = arith.constant 0.000000e+00 : f32
    %18 = vector.broadcast %cst_16 : f32 to vector<32x16xf32>
    %19 = arith.maximumf %17, %18 : vector<32x16xf32>
    %20 = vector.broadcast %8 : vector<1x16xf32> to vector<32x16xf32>
    %21 = arith.mulf %19, %20 : vector<32x16xf32>
    %22 = vector.broadcast %9 : vector<1x16xf32> to vector<32x16xf32>
    %23 = arith.addf %21, %22 : vector<32x16xf32>
    %cst_17 = arith.constant dense<0.000000e+00> : vector<32x16xf32>
    %24 = tpu.matmul %0, %23, %cst_17 {dimension_numbers = #tpu.dot_dimension_numbers<[1], [0], [0], [1], [0, 0, 1, 1], [], []>} : vector<32x32xf32>, vector<32x16xf32>, vector<32x16xf32> -> vector<32x16xf32>
    %c1_18 = arith.constant 1 : index
    %c0_19 = arith.constant 0 : index
    %c0_20 = arith.constant 0 : index
    %25 = vector.load %arg3[%c1_18, %c0_19, %c0_20] : memref<10x16x16xf32, #tpu.memory_space<vmem>>, vector<1x16x16xf32>
    %26 = vector.shape_cast %25 : vector<1x16x16xf32> to vector<16x16xf32>
    %c2_21 = arith.constant 2 : index
    %c0_22 = arith.constant 0 : index
    %c0_23 = arith.constant 0 : index
    %27 = vector.load %arg3[%c2_21, %c0_22, %c0_23] : memref<10x16x16xf32, #tpu.memory_space<vmem>>, vector<1x16x16xf32>
    %28 = vector.shape_cast %27 : vector<1x16x16xf32> to vector<16x16xf32>
    %c4 = arith.constant 4 : index
    %c0_24 = arith.constant 0 : index
    %29 = vector.load %arg4[%c4, %c0_24] : memref<21x16xf32, #tpu.memory_space<vmem>>, vector<1x16xf32>
    %c5 = arith.constant 5 : index
    %c0_25 = arith.constant 0 : index
    %30 = vector.load %arg4[%c5, %c0_25] : memref<21x16xf32, #tpu.memory_space<vmem>>, vector<1x16xf32>
    %c6 = arith.constant 6 : index
    %c0_26 = arith.constant 0 : index
    %31 = vector.load %arg4[%c6, %c0_26] : memref<21x16xf32, #tpu.memory_space<vmem>>, vector<1x16xf32>
    %c7 = arith.constant 7 : index
    %c0_27 = arith.constant 0 : index
    %32 = vector.load %arg4[%c7, %c0_27] : memref<21x16xf32, #tpu.memory_space<vmem>>, vector<1x16xf32>
    %cst_28 = arith.constant dense<0.000000e+00> : vector<32x16xf32>
    %33 = tpu.matmul %24, %26, %cst_28 {dimension_numbers = #tpu.dot_dimension_numbers<[1], [0], [0], [1], [0, 0, 1, 1], [], []>} : vector<32x16xf32>, vector<16x16xf32>, vector<32x16xf32> -> vector<32x16xf32>
    %34 = vector.broadcast %29 : vector<1x16xf32> to vector<32x16xf32>
    %35 = arith.addf %33, %34 : vector<32x16xf32>
    %cst_29 = arith.constant 0.000000e+00 : f32
    %36 = vector.broadcast %cst_29 : f32 to vector<32x16xf32>
    %37 = arith.maximumf %35, %36 : vector<32x16xf32>
    %cst_30 = arith.constant dense<0.000000e+00> : vector<32x16xf32>
    %38 = tpu.matmul %37, %28, %cst_30 {dimension_numbers = #tpu.dot_dimension_numbers<[1], [0], [0], [1], [0, 0, 1, 1], [], []>} : vector<32x16xf32>, vector<16x16xf32>, vector<32x16xf32> -> vector<32x16xf32>
    %39 = vector.broadcast %30 : vector<1x16xf32> to vector<32x16xf32>
    %40 = arith.addf %38, %39 : vector<32x16xf32>
    %cst_31 = arith.constant 0.000000e+00 : f32
    %41 = vector.broadcast %cst_31 : f32 to vector<32x16xf32>
    %42 = arith.maximumf %40, %41 : vector<32x16xf32>
    %43 = vector.broadcast %31 : vector<1x16xf32> to vector<32x16xf32>
    %44 = arith.mulf %42, %43 : vector<32x16xf32>
    %45 = vector.broadcast %32 : vector<1x16xf32> to vector<32x16xf32>
    %46 = arith.addf %44, %45 : vector<32x16xf32>
    %cst_32 = arith.constant dense<0.000000e+00> : vector<32x16xf32>
    %47 = tpu.matmul %0, %46, %cst_32 {dimension_numbers = #tpu.dot_dimension_numbers<[1], [0], [0], [1], [0, 0, 1, 1], [], []>} : vector<32x32xf32>, vector<32x16xf32>, vector<32x16xf32> -> vector<32x16xf32>
    %c3_33 = arith.constant 3 : index
    %c0_34 = arith.constant 0 : index
    %c0_35 = arith.constant 0 : index
    %48 = vector.load %arg3[%c3_33, %c0_34, %c0_35] : memref<10x16x16xf32, #tpu.memory_space<vmem>>, vector<1x16x16xf32>
    %49 = vector.shape_cast %48 : vector<1x16x16xf32> to vector<16x16xf32>
    %c4_36 = arith.constant 4 : index
    %c0_37 = arith.constant 0 : index
    %c0_38 = arith.constant 0 : index
    %50 = vector.load %arg3[%c4_36, %c0_37, %c0_38] : memref<10x16x16xf32, #tpu.memory_space<vmem>>, vector<1x16x16xf32>
    %51 = vector.shape_cast %50 : vector<1x16x16xf32> to vector<16x16xf32>
    %c8 = arith.constant 8 : index
    %c0_39 = arith.constant 0 : index
    %52 = vector.load %arg4[%c8, %c0_39] : memref<21x16xf32, #tpu.memory_space<vmem>>, vector<1x16xf32>
    %c9 = arith.constant 9 : index
    %c0_40 = arith.constant 0 : index
    %53 = vector.load %arg4[%c9, %c0_40] : memref<21x16xf32, #tpu.memory_space<vmem>>, vector<1x16xf32>
    %c10 = arith.constant 10 : index
    %c0_41 = arith.constant 0 : index
    %54 = vector.load %arg4[%c10, %c0_41] : memref<21x16xf32, #tpu.memory_space<vmem>>, vector<1x16xf32>
    %c11 = arith.constant 11 : index
    %c0_42 = arith.constant 0 : index
    %55 = vector.load %arg4[%c11, %c0_42] : memref<21x16xf32, #tpu.memory_space<vmem>>, vector<1x16xf32>
    %cst_43 = arith.constant dense<0.000000e+00> : vector<32x16xf32>
    %56 = tpu.matmul %47, %49, %cst_43 {dimension_numbers = #tpu.dot_dimension_numbers<[1], [0], [0], [1], [0, 0, 1, 1], [], []>} : vector<32x16xf32>, vector<16x16xf32>, vector<32x16xf32> -> vector<32x16xf32>
    %57 = vector.broadcast %52 : vector<1x16xf32> to vector<32x16xf32>
    %58 = arith.addf %56, %57 : vector<32x16xf32>
    %cst_44 = arith.constant 0.000000e+00 : f32
    %59 = vector.broadcast %cst_44 : f32 to vector<32x16xf32>
    %60 = arith.maximumf %58, %59 : vector<32x16xf32>
    %cst_45 = arith.constant dense<0.000000e+00> : vector<32x16xf32>
    %61 = tpu.matmul %60, %51, %cst_45 {dimension_numbers = #tpu.dot_dimension_numbers<[1], [0], [0], [1], [0, 0, 1, 1], [], []>} : vector<32x16xf32>, vector<16x16xf32>, vector<32x16xf32> -> vector<32x16xf32>
    %62 = vector.broadcast %53 : vector<1x16xf32> to vector<32x16xf32>
    %63 = arith.addf %61, %62 : vector<32x16xf32>
    %cst_46 = arith.constant 0.000000e+00 : f32
    %64 = vector.broadcast %cst_46 : f32 to vector<32x16xf32>
    %65 = arith.maximumf %63, %64 : vector<32x16xf32>
    %66 = vector.broadcast %54 : vector<1x16xf32> to vector<32x16xf32>
    %67 = arith.mulf %65, %66 : vector<32x16xf32>
    %68 = vector.broadcast %55 : vector<1x16xf32> to vector<32x16xf32>
    %69 = arith.addf %67, %68 : vector<32x16xf32>
    %cst_47 = arith.constant dense<0.000000e+00> : vector<32x16xf32>
    %70 = tpu.matmul %0, %69, %cst_47 {dimension_numbers = #tpu.dot_dimension_numbers<[1], [0], [0], [1], [0, 0, 1, 1], [], []>} : vector<32x32xf32>, vector<32x16xf32>, vector<32x16xf32> -> vector<32x16xf32>
    %c5_48 = arith.constant 5 : index
    %c0_49 = arith.constant 0 : index
    %c0_50 = arith.constant 0 : index
    %71 = vector.load %arg3[%c5_48, %c0_49, %c0_50] : memref<10x16x16xf32, #tpu.memory_space<vmem>>, vector<1x16x16xf32>
    %72 = vector.shape_cast %71 : vector<1x16x16xf32> to vector<16x16xf32>
    %c6_51 = arith.constant 6 : index
    %c0_52 = arith.constant 0 : index
    %c0_53 = arith.constant 0 : index
    %73 = vector.load %arg3[%c6_51, %c0_52, %c0_53] : memref<10x16x16xf32, #tpu.memory_space<vmem>>, vector<1x16x16xf32>
    %74 = vector.shape_cast %73 : vector<1x16x16xf32> to vector<16x16xf32>
    %c12 = arith.constant 12 : index
    %c0_54 = arith.constant 0 : index
    %75 = vector.load %arg4[%c12, %c0_54] : memref<21x16xf32, #tpu.memory_space<vmem>>, vector<1x16xf32>
    %c13 = arith.constant 13 : index
    %c0_55 = arith.constant 0 : index
    %76 = vector.load %arg4[%c13, %c0_55] : memref<21x16xf32, #tpu.memory_space<vmem>>, vector<1x16xf32>
    %c14 = arith.constant 14 : index
    %c0_56 = arith.constant 0 : index
    %77 = vector.load %arg4[%c14, %c0_56] : memref<21x16xf32, #tpu.memory_space<vmem>>, vector<1x16xf32>
    %c15 = arith.constant 15 : index
    %c0_57 = arith.constant 0 : index
    %78 = vector.load %arg4[%c15, %c0_57] : memref<21x16xf32, #tpu.memory_space<vmem>>, vector<1x16xf32>
    %cst_58 = arith.constant dense<0.000000e+00> : vector<32x16xf32>
    %79 = tpu.matmul %70, %72, %cst_58 {dimension_numbers = #tpu.dot_dimension_numbers<[1], [0], [0], [1], [0, 0, 1, 1], [], []>} : vector<32x16xf32>, vector<16x16xf32>, vector<32x16xf32> -> vector<32x16xf32>
    %80 = vector.broadcast %75 : vector<1x16xf32> to vector<32x16xf32>
    %81 = arith.addf %79, %80 : vector<32x16xf32>
    %cst_59 = arith.constant 0.000000e+00 : f32
    %82 = vector.broadcast %cst_59 : f32 to vector<32x16xf32>
    %83 = arith.maximumf %81, %82 : vector<32x16xf32>
    %cst_60 = arith.constant dense<0.000000e+00> : vector<32x16xf32>
    %84 = tpu.matmul %83, %74, %cst_60 {dimension_numbers = #tpu.dot_dimension_numbers<[1], [0], [0], [1], [0, 0, 1, 1], [], []>} : vector<32x16xf32>, vector<16x16xf32>, vector<32x16xf32> -> vector<32x16xf32>
    %85 = vector.broadcast %76 : vector<1x16xf32> to vector<32x16xf32>
    %86 = arith.addf %84, %85 : vector<32x16xf32>
    %cst_61 = arith.constant 0.000000e+00 : f32
    %87 = vector.broadcast %cst_61 : f32 to vector<32x16xf32>
    %88 = arith.maximumf %86, %87 : vector<32x16xf32>
    %89 = vector.broadcast %77 : vector<1x16xf32> to vector<32x16xf32>
    %90 = arith.mulf %88, %89 : vector<32x16xf32>
    %91 = vector.broadcast %78 : vector<1x16xf32> to vector<32x16xf32>
    %92 = arith.addf %90, %91 : vector<32x16xf32>
    %cst_62 = arith.constant dense<0.000000e+00> : vector<32x16xf32>
    %93 = tpu.matmul %0, %92, %cst_62 {dimension_numbers = #tpu.dot_dimension_numbers<[1], [0], [0], [1], [0, 0, 1, 1], [], []>} : vector<32x32xf32>, vector<32x16xf32>, vector<32x16xf32> -> vector<32x16xf32>
    %c7_63 = arith.constant 7 : index
    %c0_64 = arith.constant 0 : index
    %c0_65 = arith.constant 0 : index
    %94 = vector.load %arg3[%c7_63, %c0_64, %c0_65] : memref<10x16x16xf32, #tpu.memory_space<vmem>>, vector<1x16x16xf32>
    %95 = vector.shape_cast %94 : vector<1x16x16xf32> to vector<16x16xf32>
    %c8_66 = arith.constant 8 : index
    %c0_67 = arith.constant 0 : index
    %c0_68 = arith.constant 0 : index
    %96 = vector.load %arg3[%c8_66, %c0_67, %c0_68] : memref<10x16x16xf32, #tpu.memory_space<vmem>>, vector<1x16x16xf32>
    %97 = vector.shape_cast %96 : vector<1x16x16xf32> to vector<16x16xf32>
    %c16 = arith.constant 16 : index
    %c0_69 = arith.constant 0 : index
    %98 = vector.load %arg4[%c16, %c0_69] : memref<21x16xf32, #tpu.memory_space<vmem>>, vector<1x16xf32>
    %c17 = arith.constant 17 : index
    %c0_70 = arith.constant 0 : index
    %99 = vector.load %arg4[%c17, %c0_70] : memref<21x16xf32, #tpu.memory_space<vmem>>, vector<1x16xf32>
    %c18 = arith.constant 18 : index
    %c0_71 = arith.constant 0 : index
    %100 = vector.load %arg4[%c18, %c0_71] : memref<21x16xf32, #tpu.memory_space<vmem>>, vector<1x16xf32>
    %c19 = arith.constant 19 : index
    %c0_72 = arith.constant 0 : index
    %101 = vector.load %arg4[%c19, %c0_72] : memref<21x16xf32, #tpu.memory_space<vmem>>, vector<1x16xf32>
    %cst_73 = arith.constant dense<0.000000e+00> : vector<32x16xf32>
    %102 = tpu.matmul %93, %95, %cst_73 {dimension_numbers = #tpu.dot_dimension_numbers<[1], [0], [0], [1], [0, 0, 1, 1], [], []>} : vector<32x16xf32>, vector<16x16xf32>, vector<32x16xf32> -> vector<32x16xf32>
    %103 = vector.broadcast %98 : vector<1x16xf32> to vector<32x16xf32>
    %104 = arith.addf %102, %103 : vector<32x16xf32>
    %cst_74 = arith.constant 0.000000e+00 : f32
    %105 = vector.broadcast %cst_74 : f32 to vector<32x16xf32>
    %106 = arith.maximumf %104, %105 : vector<32x16xf32>
    %cst_75 = arith.constant dense<0.000000e+00> : vector<32x16xf32>
    %107 = tpu.matmul %106, %97, %cst_75 {dimension_numbers = #tpu.dot_dimension_numbers<[1], [0], [0], [1], [0, 0, 1, 1], [], []>} : vector<32x16xf32>, vector<16x16xf32>, vector<32x16xf32> -> vector<32x16xf32>
    %108 = vector.broadcast %99 : vector<1x16xf32> to vector<32x16xf32>
    %109 = arith.addf %107, %108 : vector<32x16xf32>
    %cst_76 = arith.constant 0.000000e+00 : f32
    %110 = vector.broadcast %cst_76 : f32 to vector<32x16xf32>
    %111 = arith.maximumf %109, %110 : vector<32x16xf32>
    %112 = vector.broadcast %100 : vector<1x16xf32> to vector<32x16xf32>
    %113 = arith.mulf %111, %112 : vector<32x16xf32>
    %114 = vector.broadcast %101 : vector<1x16xf32> to vector<32x16xf32>
    %115 = arith.addf %113, %114 : vector<32x16xf32>
    %c9_77 = arith.constant 9 : index
    %c0_78 = arith.constant 0 : index
    %c0_79 = arith.constant 0 : index
    %116 = vector.load %arg3[%c9_77, %c0_78, %c0_79] : memref<10x16x16xf32, #tpu.memory_space<vmem>>, vector<1x16x16xf32>
    %117 = vector.shape_cast %116 : vector<1x16x16xf32> to vector<16x16xf32>
    %c20 = arith.constant 20 : index
    %c0_80 = arith.constant 0 : index
    %118 = vector.load %arg4[%c20, %c0_80] : memref<21x16xf32, #tpu.memory_space<vmem>>, vector<1x16xf32>
    %cst_81 = arith.constant dense<0.000000e+00> : vector<32x16xf32>
    %119 = tpu.matmul %115, %117, %cst_81 {dimension_numbers = #tpu.dot_dimension_numbers<[1], [0], [0], [1], [0, 0, 1, 1], [], []>} : vector<32x16xf32>, vector<16x16xf32>, vector<32x16xf32> -> vector<32x16xf32>
    %120 = vector.broadcast %118 : vector<1x16xf32> to vector<32x16xf32>
    %121 = arith.addf %119, %120 : vector<32x16xf32>
    %cst_82 = arith.constant 0.000000e+00 : f32
    %122 = vector.broadcast %cst_82 : f32 to vector<32x16xf32>
    %123 = arith.maximumf %121, %122 : vector<32x16xf32>
    %c0_83 = arith.constant 0 : index
    %c0_84 = arith.constant 0 : index
    %124 = vector.load %arg5[%c0_83, %c0_84] : memref<16x2xf32, #tpu.memory_space<vmem>>, vector<16x2xf32>
    %cst_85 = arith.constant dense<0.000000e+00> : vector<32x2xf32>
    %125 = tpu.matmul %123, %124, %cst_85 {dimension_numbers = #tpu.dot_dimension_numbers<[1], [0], [0], [1], [0, 0, 1, 1], [], []>} : vector<32x16xf32>, vector<16x2xf32>, vector<32x2xf32> -> vector<32x2xf32>
    %c0_86 = arith.constant 0 : index
    %c0_87 = arith.constant 0 : index
    %126 = vector.load %arg6[%c0_86, %c0_87] : memref<1x2xf32, #tpu.memory_space<vmem>>, vector<1x2xf32>
    %127 = vector.broadcast %126 : vector<1x2xf32> to vector<32x2xf32>
    %128 = arith.addf %125, %127 : vector<32x2xf32>
    %cst_88 = arith.constant dense<0xFF800000> : vector<32xf32>
    %129 = vector.multi_reduction <maximumf>, %128, %cst_88 [1] : vector<32x2xf32> to vector<32xf32>
    %130 = vector.shape_cast %129 : vector<32xf32> to vector<32x1xf32>
    %131 = vector.broadcast %130 : vector<32x1xf32> to vector<32x2xf32>
    %132 = arith.subf %128, %131 : vector<32x2xf32>
    %133 = math.exp %132 : vector<32x2xf32>
    %cst_89 = arith.constant dense<0.000000e+00> : vector<32xf32>
    %134 = vector.multi_reduction <add>, %133, %cst_89 [1] : vector<32x2xf32> to vector<32xf32>
    %135 = vector.shape_cast %134 : vector<32xf32> to vector<32x1xf32>
    %136 = math.log %135 : vector<32x1xf32>
    %137 = vector.broadcast %136 : vector<32x1xf32> to vector<32x2xf32>
    %138 = arith.subf %132, %137 : vector<32x2xf32>
    %c0_90 = arith.constant 0 : index
    %c0_91 = arith.constant 0 : index
    %139 = vector.load %arg7[%c0_90, %c0_91] : memref<32x2xf32, #tpu.memory_space<vmem>>, vector<32x2xf32>
    tpu.vector_store %arg7[%c0_90, %c0_91], %138 {strides = array<i32>} : memref<32x2xf32, #tpu.memory_space<vmem>>, vector<32x2xf32>,
    return
  }
}

</mosaic_0001>

<llo_original>
// kernel: tpu_custom_call.1
$region0: #{tpu_custom_call.1}
  #allocation0 [shape = 'u32[]', space=smem, size = 0x4, offset = 0x4, fixed_abs, tag = 'smem constant byte address 0x4 - core index']
  #allocation1 [shape = 'u32[144,128]{1,0:T(1,128)}', space=vmem, size = 0x12000, scoped, tag = 'internal scratch']
  %s0 = inlined_call_operand.vmem [shape: f32[32,32], index: 0, kind: input, shape index: {}]
  %s1 = inlined_call_operand.vmem [shape: f32[32,40], index: 1, kind: input, shape index: {}]
  %s2 = inlined_call_operand.vmem [shape: f32[40,16], index: 2, kind: input, shape index: {}]
  %s3 = inlined_call_operand.hbm [shape: f32[10,16,16], index: 3, kind: input, shape index: {}]
  %s4 = inlined_call_operand.vmem [shape: f32[21,16], index: 4, kind: input, shape index: {}]
  %s5 = inlined_call_operand.vmem [shape: f32[16,2], index: 5, kind: input, shape index: {}]
  %s6 = inlined_call_operand.vmem [shape: f32[1,2], index: 6, kind: input, shape index: {}]
  %s7 = inlined_call_operand.vmem [shape: f32[32,2], index: 7, kind: output, shape index: {}]
  %s8 = sld [smem:[#allocation0]]
  $region42: #{tpu_custom_call.1} parent=0
    _
  %s10 = ssub.s32 1, %s8
  %s11 = scalar_select 0, %s10, %s8
  $region1: #{tpu_custom_call.1} parent=0
    #allocation2 [shape = 'u8[81920]{0}', space=vmem, size = 0x14000, scoped, tag = 'input window, operand 3, single buffered']
    #allocation3 [shape = 's32[1]{0}', space=sflag, size = 0x4, scoped, tag = 'scoped memory for tpu_custom_call.1']
    %12 = vsyncpa [#allocation3], 0
    // Predicated region
    $region2: #{tpu_custom_call.1} parent=1 // pred_check
      _
    $region3: #{tpu_custom_call.1} parent=1 // pred_check_branch
      %14 = sbr.rel (0) target = $region5
    $region4: #{tpu_custom_call.1} parent=1 // pred_region
      _
    $region5: #{tpu_custom_call.1} parent=1 // pred_fallthru
      _
    // Predicated region
    $region6: #{tpu_custom_call.1} parent=1 // pred_check
      _
    $region7: #{tpu_custom_call.1} parent=1 // pred_check_branch
      %16 = sbr.rel (0) target = $region9
    $region8: #{tpu_custom_call.1} parent=1 // pred_region
      _
    $region9: #{tpu_custom_call.1} parent=1 // pred_fallthru
      _
    // Predicated region
    $region10: #{tpu_custom_call.1} parent=1 // pred_check
      _
    $region11: #{tpu_custom_call.1} parent=1 // pred_check_branch
      %18 = sbr.rel (0) target = $region13
    $region12: #{tpu_custom_call.1} parent=1 // pred_region
      _
    $region13: #{tpu_custom_call.1} parent=1 // pred_fallthru
      _
    // Predicated region
    $region14: #{tpu_custom_call.1} parent=1 // pred_check
      _
    $region15: #{tpu_custom_call.1} parent=1 // pred_check_branch
      %20 = sbr.rel (0) target = $region17
    $region16: #{tpu_custom_call.1} parent=1 // pred_region
      %s22 = ssub.s32 2560, 2560
      %23 = vsyncadd [#allocation3], %s22
      %s24 = sshll.u32 [#allocation2], 4
      %s25 = int_to_ptr.vmem [resolvable:$true] %s24
      %30 = dma.hbm_to_vmem [thread:$0]  %s3, 2560, %s25, [#allocation3], 128, 128, 8
    $region17: #{tpu_custom_call.1} parent=1 // pred_fallthru
      _
    // Predicated region
    $region18: #{tpu_custom_call.1} parent=1 // pred_check
      _
    $region19: #{tpu_custom_call.1} parent=1 // pred_check_branch
      %32 = sbr.rel (0) target = $region21
    $region20: #{tpu_custom_call.1} parent=1 // pred_region
      _
    $region21: #{tpu_custom_call.1} parent=1 // pred_fallthru
      _
    // Predicated region
    $region22: #{tpu_custom_call.1} parent=1 // pred_check
      _
    $region23: #{tpu_custom_call.1} parent=1 // pred_check_branch
      %34 = sbr.rel (0) target = $region25
    $region24: #{tpu_custom_call.1} parent=1 // pred_region
      _
    $region25: #{tpu_custom_call.1} parent=1 // pred_fallthru
      _
    // Predicated region
    $region26: #{tpu_custom_call.1} parent=1 // pred_check
      _
    $region27: #{tpu_custom_call.1} parent=1 // pred_check_branch
      %36 = sbr.rel (0) target = $region29
    $region28: #{tpu_custom_call.1} parent=1 // pred_region
      _
    $region29: #{tpu_custom_call.1} parent=1 // pred_fallthru
      _
    // Predicated region
    $region30: #{tpu_custom_call.1} parent=1 // pred_check
      _
    $region31: #{tpu_custom_call.1} parent=1 // pred_check_branch
      %38 = sbr.rel (0) target = $region33
    $region32: #{tpu_custom_call.1} parent=1 // pred_region
      %39 = dma.done [#allocation3], 2560
    $region33: #{tpu_custom_call.1} parent=1 // pred_fallthru
      _
    %v40 = vld [vmem:[%s0] sm:$0xff]
    %v41 = vld [vmem:[%s0 + $0x8] sm:$0xff]
    %v42 = vld [vmem:[%s0 + $0x10] sm:$0xff]
    %v43 = vld [vmem:[%s0 + $0x18] sm:$0xff]
    %v44 = vld [vmem:[%s1] sm:$0xff]
    %v45 = vld [vmem:[%s1 + $0x8] sm:$0xff]
    %v46 = vld [vmem:[%s1 + $0x10] sm:$0xff]
    %v47 = vld [vmem:[%s1 + $0x18] sm:$0xff]
    %vm48 = vcmask 261120
    %v50 = vsel %vm48, %v40, 0
    %v53 = vsel %vm48, %v41, 0
    %v56 = vsel %vm48, %v42, 0
    %v59 = vsel %vm48, %v43, 0
    %61 = vmatprep.subr.mxu0 0.0
    %62 = vmatpush1.msra.mxu0 0.0
    %63 = vmatprep.subr.mxu0 0.0
    %64 = vmatpush1.msra.mxu0 0.0
    %65 = vmatprep.subr.mxu0 0.0
    %66 = vmatpush1.msra.mxu0 0.0
    %67 = vmatprep.subr.mxu0 0.0
    %68 = vmatpush1.msra.mxu0 0.0
    %69 = vmatprep.subr.mxu0 0.0
    %70 = vmatpush1.msra.mxu0 0.0
    %71 = vmatprep.subr.mxu0 0.0
    %72 = vmatpush1.msra.mxu0 0.0
    %73 = vmatprep.subr.mxu0 0.0
    %74 = vmatpush1.msra.mxu0 0.0
    %75 = vmatprep.subr.mxu0 0.0
    %76 = vmatpush1.msra.mxu0 0.0
    %77 = vmatprep.subr.mxu0 0.0
    %78 = vmatpush1.msra.mxu0 0.0
    %79 = vmatprep.subr.mxu0 0.0
    %80 = vmatpush1.msra.mxu0 0.0
    %81 = vmatprep.subr.mxu0 0.0
    %82 = vmatpush1.msra.mxu0 0.0
    %83 = vmatprep.subr.mxu0 0.0
    %84 = vmatpush1.msra.mxu0 0.0
    %85 = vmatprep.subr.mxu0 0.0
    %86 = vmatpush1.msra.mxu0 %v47
    %87 = vmatprep.subr.mxu0 0.0
    %88 = vmatpush1.msra.mxu0 %v46
    %89 = vmatprep.subr.mxu0 0.0
    %90 = vmatpush1.msra.mxu0 %v45
    %91 = vmatprep.subr.mxu0 0.0
    %92 = vmatpush1.msra.mxu0 %v44
    %93 = vmatprep.subr.mxu0 0.0
    %94 = vmatpush2.msra.mxu0 0.0
    %95 = vmatprep.subr.mxu0 0.0
    %96 = vmatpush2.msra.mxu0 0.0
    %97 = vmatprep.subr.mxu0 0.0
    %98 = vmatpush2.msra.mxu0 0.0
    %99 = vmatprep.subr.mxu0 0.0
    %100 = vmatpush2.msra.mxu0 0.0
    %101 = vmatprep.subr.mxu0 0.0
    %102 = vmatpush2.msra.mxu0 0.0
    %103 = vmatprep.subr.mxu0 0.0
    %104 = vmatpush2.msra.mxu0 0.0
    %105 = vmatprep.subr.mxu0 0.0
    %106 = vmatpush2.msra.mxu0 0.0
    %107 = vmatprep.subr.mxu0 0.0
    %108 = vmatpush2.msra.mxu0 0.0
    %109 = vmatprep.subr.mxu0 0.0
    %110 = vmatpush2.msra.mxu0 0.0
    %111 = vmatprep.subr.mxu0 0.0
    %112 = vmatpush2.msra.mxu0 0.0
    %113 = vmatprep.subr.mxu0 0.0
    %114 = vmatpush2.msra.mxu0 0.0
    %115 = vmatprep.subr.mxu0 0.0
    %116 = vmatpush2.msra.mxu0 0.0
    %117 = vmatprep.subr.mxu0 0.0
    %118 = vmatpush2.msra.mxu0 0.0
    %119 = vmatprep.subr.mxu0 0.0
    %120 = vmatpush2.msra.mxu0 0.0
    %121 = vmatprep.subr.mxu0 0.0
    %122 = vmatpush2.msra.mxu0 0.0
    %123 = vmatprep.subr.mxu0 0.0
    %124 = vmatpush2.msra.mxu0 0.0
    %125 = vmatprep.mubr.f32.mxu0 0.0
    %126 = vmatmul.mubr.f32.gmra.mxu0 %v50
    %v127 = vpop.f32.mrf.mxu0
    %v128 = vadd.f32 0.0, %v127
    %v129 = vpop.f32.mrf.mxu0
    %130 = vmatprep.mubr.f32.mxu0 0.0
    %131 = vmatmul.mubr.f32.gmra.mxu0 %v53
    %v132 = vpop.f32.mrf.mxu0
    %v133 = vadd.f32 0.0, %v132
    %v134 = vpop.f32.mrf.mxu0
    %135 = vmatprep.mubr.f32.mxu0 0.0
    %136 = vmatmul.mubr.f32.gmra.mxu0 %v56
    %v137 = vpop.f32.mrf.mxu0
    %v138 = vadd.f32 0.0, %v137
    %v139 = vpop.f32.mrf.mxu0
    %140 = vmatprep.mubr.f32.mxu0 0.0
    %141 = vmatmul.mubr.f32.gmra.mxu0 %v59
    %v142 = vpop.f32.mrf.mxu0
    %v143 = vadd.f32 0.0, %v142
    %v144 = vpop.f32.mrf.mxu0
    %145 = vdwg.mxu0
    %v146 = vld [vmem:[%s2] sm:$0xff]
    %v147 = vld [vmem:[%s2 + $0x8] sm:$0xff]
    %v148 = vld [vmem:[%s2 + $0x10] sm:$0xff]
    %v149 = vld [vmem:[%s2 + $0x18] sm:$0xff]
    %v150 = vld [vmem:[%s2 + $0x20] sm:$0xff]
    %v151 = vld [vmem:[#allocation2] sm:$0xff]
    %v152 = vld [vmem:[#allocation2 + $0x8] sm:$0xff]
    %v153 = vld [vmem:[%s4] sm:$0x1]
    %v154 = vld [vmem:[%s4 + $0x1] sm:$0x1]
    %v155 = vld [vmem:[%s4 + $0x2] sm:$0x1]
    %v156 = vld [vmem:[%s4 + $0x3] sm:$0x1]
    %v157 = vlaneseq
    %v158 = vshrl.u32 %v157, 7
    %v159 = vsub.s32 0, %v158
    %v160 = vrot.slane %v153, %v159
    %vm161 = vcmask 326656
    %v163 = vsel %vm161, %v128, 0
    %v166 = vsel %vm161, %v133, 0
    %v169 = vsel %vm161, %v138, 0
    %v172 = vsel %vm161, %v143, 0
    %174 = vmatprep.subr.mxu0 0.0
    %175 = vmatpush1.msra.mxu0 0.0
    %176 = vmatprep.subr.mxu0 0.0
    %177 = vmatpush1.msra.mxu0 0.0
    %178 = vmatprep.subr.mxu0 0.0
    %179 = vmatpush1.msra.mxu0 0.0
    %180 = vmatprep.subr.mxu0 0.0
    %181 = vmatpush1.msra.mxu0 0.0
    %182 = vmatprep.subr.mxu0 0.0
    %183 = vmatpush1.msra.mxu0 0.0
    %184 = vmatprep.subr.mxu0 0.0
    %185 = vmatpush1.msra.mxu0 0.0
    %186 = vmatprep.subr.mxu0 0.0
    %187 = vmatpush1.msra.mxu0 0.0
    %188 = vmatprep.subr.mxu0 0.0
    %189 = vmatpush1.msra.mxu0 0.0
    %190 = vmatprep.subr.mxu0 0.0
    %191 = vmatpush1.msra.mxu0 0.0
    %192 = vmatprep.subr.mxu0 0.0
    %193 = vmatpush1.msra.mxu0 0.0
    %194 = vmatprep.subr.mxu0 0.0
    %195 = vmatpush1.msra.mxu0 0.0
    %196 = vmatprep.subr.mxu0 0.0
    %197 = vmatpush1.msra.mxu0 %v150
    %198 = vmatprep.subr.mxu0 0.0
    %199 = vmatpush1.msra.mxu0 %v149
    %200 = vmatprep.subr.mxu0 0.0
    %201 = vmatpush1.msra.mxu0 %v148
    %202 = vmatprep.subr.mxu0 0.0
    %203 = vmatpush1.msra.mxu0 %v147
    %204 = vmatprep.subr.mxu0 0.0
    %205 = vmatpush1.msra.mxu0 %v146
    %206 = vmatprep.subr.mxu0 0.0
    %207 = vmatpush2.msra.mxu0 0.0
    %208 = vmatprep.subr.mxu0 0.0
    %209 = vmatpush2.msra.mxu0 0.0
    %210 = vmatprep.subr.mxu0 0.0
    %211 = vmatpush2.msra.mxu0 0.0
    %212 = vmatprep.subr.mxu0 0.0
    %213 = vmatpush2.msra.mxu0 0.0
    %214 = vmatprep.subr.mxu0 0.0
    %215 = vmatpush2.msra.mxu0 0.0
    %216 = vmatprep.subr.mxu0 0.0
    %217 = vmatpush2.msra.mxu0 0.0
    %218 = vmatprep.subr.mxu0 0.0
    %219 = vmatpush2.msra.mxu0 0.0
    %220 = vmatprep.subr.mxu0 0.0
    %221 = vmatpush2.msra.mxu0 0.0
    %222 = vmatprep.subr.mxu0 0.0
    %223 = vmatpush2.msra.mxu0 0.0
    %224 = vmatprep.subr.mxu0 0.0
    %225 = vmatpush2.msra.mxu0 0.0
    %226 = vmatprep.subr.mxu0 0.0
    %227 = vmatpush2.msra.mxu0 0.0
    %228 = vmatprep.subr.mxu0 0.0
    %229 = vmatpush2.msra.mxu0 0.0
    %230 = vmatprep.subr.mxu0 0.0
    %231 = vmatpush2.msra.mxu0 0.0
    %232 = vmatprep.subr.mxu0 0.0
    %233 = vmatpush2.msra.mxu0 0.0
    %234 = vmatprep.subr.mxu0 0.0
    %235 = vmatpush2.msra.mxu0 0.0
    %236 = vmatprep.subr.mxu0 0.0
    %237 = vmatpush2.msra.mxu0 0.0
    %238 = vmatprep.mubr.f32.mxu0 0.0
    %239 = vmatmul.mubr.f32.gmra.mxu0 %v163
    %v240 = vpop.f32.mrf.mxu0
    %v241 = vadd.f32 %v160, %v240
    %v242 = vpop.f32.mrf.mxu0
    %243 = vmatprep.mubr.f32.mxu0 0.0
    %244 = vmatmul.mubr.f32.gmra.mxu0 %v166
    %v245 = vpop.f32.mrf.mxu0
    %v246 = vadd.f32 %v160, %v245
    %v247 = vpop.f32.mrf.mxu0
    %248 = vmatprep.mubr.f32.mxu0 0.0
    %249 = vmatmul.mubr.f32.gmra.mxu0 %v169
    %v250 = vpop.f32.mrf.mxu0
    %v251 = vadd.f32 %v160, %v250
    %v252 = vpop.f32.mrf.mxu0
    %253 = vmatprep.mubr.f32.mxu0 0.0
    %254 = vmatmul.mubr.f32.gmra.mxu0 %v172
    %v255 = vpop.f32.mrf.mxu0
    %v256 = vadd.f32 %v160, %v255
    %v257 = vpop.f32.mrf.mxu0
    %258 = vdwg.mxu0
    %v259 = vmax.f32 %v241, 0.0
    %v260 = vmax.f32 %v246, 0.0
    %v261 = vmax.f32 %v251, 0.0
    %v262 = vmax.f32 %v256, 0.0
    %v263 = vlaneseq
    %v264 = vshrl.u32 %v263, 7
    %v265 = vsub.s32 0, %v264
    %v266 = vrot.slane %v154, %v265
    %vm267 = vcmask 130048
    %v269 = vsel %vm267, %v259, 0
    %v272 = vsel %vm267, %v260, 0
    %v275 = vsel %vm267, %v261, 0
    %v278 = vsel %vm267, %v262, 0
    %280 = vmatprep.subr.mxu0 0.0
    %281 = vmatpush1.msra.mxu0 0.0
    %282 = vmatprep.subr.mxu0 0.0
    %283 = vmatpush1.msra.mxu0 0.0
    %284 = vmatprep.subr.mxu0 0.0
    %285 = vmatpush1.msra.mxu0 0.0
    %286 = vmatprep.subr.mxu0 0.0
    %287 = vmatpush1.msra.mxu0 0.0
    %288 = vmatprep.subr.mxu0 0.0
    %289 = vmatpush1.msra.mxu0 0.0
    %290 = vmatprep.subr.mxu0 0.0
    %291 = vmatpush1.msra.mxu0 0.0
    %292 = vmatprep.subr.mxu0 0.0
    %293 = vmatpush1.msra.mxu0 0.0
    %294 = vmatprep.subr.mxu0 0.0
    %295 = vmatpush1.msra.mxu0 0.0
    %296 = vmatprep.subr.mxu0 0.0
    %297 = vmatpush1.msra.mxu0 0.0
    %298 = vmatprep.subr.mxu0 0.0
    %299 = vmatpush1.msra.mxu0 0.0
    %300 = vmatprep.subr.mxu0 0.0
    %301 = vmatpush1.msra.mxu0 0.0
    %302 = vmatprep.subr.mxu0 0.0
    %303 = vmatpush1.msra.mxu0 0.0
    %304 = vmatprep.subr.mxu0 0.0
    %305 = vmatpush1.msra.mxu0 0.0
    %306 = vmatprep.subr.mxu0 0.0
    %307 = vmatpush1.msra.mxu0 0.0
    %308 = vmatprep.subr.mxu0 0.0
    %309 = vmatpush1.msra.mxu0 %v152
    %310 = vmatprep.subr.mxu0 0.0
    %311 = vmatpush1.msra.mxu0 %v151
    %312 = vmatprep.subr.mxu0 0.0
    %313 = vmatpush2.msra.mxu0 0.0
    %314 = vmatprep.subr.mxu0 0.0
    %315 = vmatpush2.msra.mxu0 0.0
    %316 = vmatprep.subr.mxu0 0.0
    %317 = vmatpush2.msra.mxu0 0.0
    %318 = vmatprep.subr.mxu0 0.0
    %319 = vmatpush2.msra.mxu0 0.0
    %320 = vmatprep.subr.mxu0 0.0
    %321 = vmatpush2.msra.mxu0 0.0
    %322 = vmatprep.subr.mxu0 0.0
    %323 = vmatpush2.msra.mxu0 0.0
    %324 = vmatprep.subr.mxu0 0.0
    %325 = vmatpush2.msra.mxu0 0.0
    %326 = vmatprep.subr.mxu0 0.0
    %327 = vmatpush2.msra.mxu0 0.0
    %328 = vmatprep.subr.mxu0 0.0
    %329 = vmatpush2.msra.mxu0 0.0
    %330 = vmatprep.subr.mxu0 0.0
    %331 = vmatpush2.msra.mxu0 0.0
    %332 = vmatprep.subr.mxu0 0.0
    %333 = vmatpush2.msra.mxu0 0.0
    %334 = vmatprep.subr.mxu0 0.0
    %335 = vmatpush2.msra.mxu0 0.0
    %336 = vmatprep.subr.mxu0 0.0
    %337 = vmatpush2.msra.mxu0 0.0
    %338 = vmatprep.subr.mxu0 0.0
    %339 = vmatpush2.msra.mxu0 0.0
    %340 = vmatprep.subr.mxu0 0.0
    %341 = vmatpush2.msra.mxu0 0.0
    %342 = vmatprep.subr.mxu0 0.0
    %343 = vmatpush2.msra.mxu0 0.0
    %344 = vmatprep.mubr.f32.mxu0 0.0
    %345 = vmatmul.mubr.f32.gmra.mxu0 %v269
    %v346 = vpop.f32.mrf.mxu0
    %v347 = vadd.f32 %v266, %v346
    %v348 = vpop.f32.mrf.mxu0
    %349 = vmatprep.mubr.f32.mxu0 0.0
    %350 = vmatmul.mubr.f32.gmra.mxu0 %v272
    %v351 = vpop.f32.mrf.mxu0
    %v352 = vadd.f32 %v266, %v351
    %v353 = vpop.f32.mrf.mxu0
    %354 = vmatprep.mubr.f32.mxu0 0.0
    %355 = vmatmul.mubr.f32.gmra.mxu0 %v275
    %v356 = vpop.f32.mrf.mxu0
    %v357 = vadd.f32 %v266, %v356
    %v358 = vpop.f32.mrf.mxu0
    %359 = vmatprep.mubr.f32.mxu0 0.0
    %360 = vmatmul.mubr.f32.gmra.mxu0 %v278
    %v361 = vpop.f32.mrf.mxu0
    %v362 = vadd.f32 %v266, %v361
    %v363 = vpop.f32.mrf.mxu0
    %364 = vdwg.mxu0
    %v365 = vmax.f32 %v347, 0.0
    %v366 = vmax.f32 %v352, 0.0
    %v367 = vmax.f32 %v357, 0.0
    %v368 = vmax.f32 %v362, 0.0
    %v369 = vlaneseq
    %v370 = vshrl.u32 %v369, 7
    %v371 = vsub.s32 0, %v370
    %v372 = vrot.slane %v155, %v371
    %v373 = vmul.f32 %v365, %v372
    %v374 = vmul.f32 %v366, %v372
    %v375 = vmul.f32 %v367, %v372
    %v376 = vmul.f32 %v368, %v372
    %v377 = vlaneseq
    %v378 = vshrl.u32 %v377, 7
    %v379 = vsub.s32 0, %v378
    %v380 = vrot.slane %v156, %v379
    %v381 = vadd.f32 %v373, %v380
    %v382 = vadd.f32 %v374, %v380
    %v383 = vadd.f32 %v375, %v380
    %v384 = vadd.f32 %v376, %v380
    %385 = vmatprep.subr.mxu0 0.0
    %386 = vmatpush1.msra.mxu0 0.0
    %387 = vmatprep.subr.mxu0 0.0
    %388 = vmatpush1.msra.mxu0 0.0
    %389 = vmatprep.subr.mxu0 0.0
    %390 = vmatpush1.msra.mxu0 0.0
    %391 = vmatprep.subr.mxu0 0.0
    %392 = vmatpush1.msra.mxu0 0.0
    %393 = vmatprep.subr.mxu0 0.0
    %394 = vmatpush1.msra.mxu0 0.0
    %395 = vmatprep.subr.mxu0 0.0
    %396 = vmatpush1.msra.mxu0 0.0
    %397 = vmatprep.subr.mxu0 0.0
    %398 = vmatpush1.msra.mxu0 0.0
    %399 = vmatprep.subr.mxu0 0.0
    %400 = vmatpush1.msra.mxu0 0.0
    %401 = vmatprep.subr.mxu0 0.0
    %402 = vmatpush1.msra.mxu0 0.0
    %403 = vmatprep.subr.mxu0 0.0
    %404 = vmatpush1.msra.mxu0 0.0
    %405 = vmatprep.subr.mxu0 0.0
    %406 = vmatpush1.msra.mxu0 0.0
    %407 = vmatprep.subr.mxu0 0.0
    %408 = vmatpush1.msra.mxu0 0.0
    %409 = vmatprep.subr.mxu0 0.0
    %410 = vmatpush1.msra.mxu0 %v384
    %411 = vmatprep.subr.mxu0 0.0
    %412 = vmatpush1.msra.mxu0 %v383
    %413 = vmatprep.subr.mxu0 0.0
    %414 = vmatpush1.msra.mxu0 %v382
    %415 = vmatprep.subr.mxu0 0.0
    %416 = vmatpush1.msra.mxu0 %v381
    %417 = vmatprep.subr.mxu0 0.0
    %418 = vmatpush2.msra.mxu0 0.0
    %419 = vmatprep.subr.mxu0 0.0
    %420 = vmatpush2.msra.mxu0 0.0
    %421 = vmatprep.subr.mxu0 0.0
    %422 = vmatpush2.msra.mxu0 0.0
    %423 = vmatprep.subr.mxu0 0.0
    %424 = vmatpush2.msra.mxu0 0.0
    %425 = vmatprep.subr.mxu0 0.0
    %426 = vmatpush2.msra.mxu0 0.0
    %427 = vmatprep.subr.mxu0 0.0
    %428 = vmatpush2.msra.mxu0 0.0
    %429 = vmatprep.subr.mxu0 0.0
    %430 = vmatpush2.msra.mxu0 0.0
    %431 = vmatprep.subr.mxu0 0.0
    %432 = vmatpush2.msra.mxu0 0.0
    %433 = vmatprep.subr.mxu0 0.0
    %434 = vmatpush2.msra.mxu0 0.0
    %435 = vmatprep.subr.mxu0 0.0
    %436 = vmatpush2.msra.mxu0 0.0
    %437 = vmatprep.subr.mxu0 0.0
    %438 = vmatpush2.msra.mxu0 0.0
    %439 = vmatprep.subr.mxu0 0.0
    %440 = vmatpush2.msra.mxu0 0.0
    %441 = vmatprep.subr.mxu0 0.0
    %442 = vmatpush2.msra.mxu0 0.0
    %443 = vmatprep.subr.mxu0 0.0
    %444 = vmatpush2.msra.mxu0 0.0
    %445 = vmatprep.subr.mxu0 0.0
    %446 = vmatpush2.msra.mxu0 0.0
    %447 = vmatprep.subr.mxu0 0.0
    %448 = vmatpush2.msra.mxu0 0.0
    %449 = vmatprep.mubr.f32.mxu0 0.0
    %450 = vmatmul.mubr.f32.gmra.mxu0 %v50
    %v451 = vpop.f32.mrf.mxu0
    %v452 = vadd.f32 0.0, %v451
    %v453 = vpop.f32.mrf.mxu0
    %454 = vmatprep.mubr.f32.mxu0 0.0
    %455 = vmatmul.mubr.f32.gmra.mxu0 %v53
    %v456 = vpop.f32.mrf.mxu0
    %v457 = vadd.f32 0.0, %v456
    %v458 = vpop.f32.mrf.mxu0
    %459 = vmatprep.mubr.f32.mxu0 0.0
    %460 = vmatmul.mubr.f32.gmra.mxu0 %v56
    %v461 = vpop.f32.mrf.mxu0
    %v462 = vadd.f32 0.0, %v461
    %v463 = vpop.f32.mrf.mxu0
    %464 = vmatprep.mubr.f32.mxu0 0.0
    %465 = vmatmul.mubr.f32.gmra.mxu0 %v59
    %v466 = vpop.f32.mrf.mxu0
    %v467 = vadd.f32 0.0, %v466
    %v468 = vpop.f32.mrf.mxu0
    %469 = vdwg.mxu0
    %s470 = scalar_lea.vmem [#allocation2], 16
    %v471 = vld [vmem:[%s470] sm:$0xff]
    %v472 = vld [vmem:[%s470 + $0x8] sm:$0xff]
    %s473 = scalar_lea.vmem [#allocation2], 32
    %v474 = vld [vmem:[%s473] sm:$0xff]
    %v475 = vld [vmem:[%s473 + $0x8] sm:$0xff]
    %v476 = vld [vmem:[%s4 + $0x4] sm:$0x1]
    %v477 = vld [vmem:[%s4 + $0x5] sm:$0x1]
    %v478 = vld [vmem:[%s4 + $0x6] sm:$0x1]
    %v479 = vld [vmem:[%s4 + $0x7] sm:$0x1]
    %v480 = vlaneseq
    %v481 = vshrl.u32 %v480, 7
    %v482 = vsub.s32 0, %v481
    %v483 = vrot.slane %v476, %v482
    %v485 = vsel %vm267, %v452, 0
    %v488 = vsel %vm267, %v457, 0
    %v491 = vsel %vm267, %v462, 0
    %v494 = vsel %vm267, %v467, 0
    %496 = vmatprep.subr.mxu0 0.0
    %497 = vmatpush1.msra.mxu0 0.0
    %498 = vmatprep.subr.mxu0 0.0
    %499 = vmatpush1.msra.mxu0 0.0
    %500 = vmatprep.subr.mxu0 0.0
    %501 = vmatpush1.msra.mxu0 0.0
    %502 = vmatprep.subr.mxu0 0.0
    %503 = vmatpush1.msra.mxu0 0.0
    %504 = vmatprep.subr.mxu0 0.0
    %505 = vmatpush1.msra.mxu0 0.0
    %506 = vmatprep.subr.mxu0 0.0
    %507 = vmatpush1.msra.mxu0 0.0
    %508 = vmatprep.subr.mxu0 0.0
    %509 = vmatpush1.msra.mxu0 0.0
    %510 = vmatprep.subr.mxu0 0.0
    %511 = vmatpush1.msra.mxu0 0.0
    %512 = vmatprep.subr.mxu0 0.0
    %513 = vmatpush1.msra.mxu0 0.0
    %514 = vmatprep.subr.mxu0 0.0
    %515 = vmatpush1.msra.mxu0 0.0
    %516 = vmatprep.subr.mxu0 0.0
    %517 = vmatpush1.msra.mxu0 0.0
    %518 = vmatprep.subr.mxu0 0.0
    %519 = vmatpush1.msra.mxu0 0.0
    %520 = vmatprep.subr.mxu0 0.0
    %521 = vmatpush1.msra.mxu0 0.0
    %522 = vmatprep.subr.mxu0 0.0
    %523 = vmatpush1.msra.mxu0 0.0
    %524 = vmatprep.subr.mxu0 0.0
    %525 = vmatpush1.msra.mxu0 %v472
    %526 = vmatprep.subr.mxu0 0.0
    %527 = vmatpush1.msra.mxu0 %v471
    %528 = vmatprep.subr.mxu0 0.0
    %529 = vmatpush2.msra.mxu0 0.0
    %530 = vmatprep.subr.mxu0 0.0
    %531 = vmatpush2.msra.mxu0 0.0
    %532 = vmatprep.subr.mxu0 0.0
    %533 = vmatpush2.msra.mxu0 0.0
    %534 = vmatprep.subr.mxu0 0.0
    %535 = vmatpush2.msra.mxu0 0.0
    %536 = vmatprep.subr.mxu0 0.0
    %537 = vmatpush2.msra.mxu0 0.0
    %538 = vmatprep.subr.mxu0 0.0
    %539 = vmatpush2.msra.mxu0 0.0
    %540 = vmatprep.subr.mxu0 0.0
    %541 = vmatpush2.msra.mxu0 0.0
    %542 = vmatprep.subr.mxu0 0.0
    %543 = vmatpush2.msra.mxu0 0.0
    %544 = vmatprep.subr.mxu0 0.0
    %545 = vmatpush2.msra.mxu0 0.0
    %546 = vmatprep.subr.mxu0 0.0
    %547 = vmatpush2.msra.mxu0 0.0
    %548 = vmatprep.subr.mxu0 0.0
    %549 = vmatpush2.msra.mxu0 0.0
    %550 = vmatprep.subr.mxu0 0.0
    %551 = vmatpush2.msra.mxu0 0.0
    %552 = vmatprep.subr.mxu0 0.0
    %553 = vmatpush2.msra.mxu0 0.0
    %554 = vmatprep.subr.mxu0 0.0
    %555 = vmatpush2.msra.mxu0 0.0
    %556 = vmatprep.subr.mxu0 0.0
    %557 = vmatpush2.msra.mxu0 0.0
    %558 = vmatprep.subr.mxu0 0.0
    %559 = vmatpush2.msra.mxu0 0.0
    %560 = vmatprep.mubr.f32.mxu0 0.0
    %561 = vmatmul.mubr.f32.gmra.mxu0 %v485
    %v562 = vpop.f32.mrf.mxu0
    %v563 = vadd.f32 %v483, %v562
    %v564 = vpop.f32.mrf.mxu0
    %565 = vmatprep.mubr.f32.mxu0 0.0
    %566 = vmatmul.mubr.f32.gmra.mxu0 %v488
    %v567 = vpop.f32.mrf.mxu0
    %v568 = vadd.f32 %v483, %v567
    %v569 = vpop.f32.mrf.mxu0
    %570 = vmatprep.mubr.f32.mxu0 0.0
    %571 = vmatmul.mubr.f32.gmra.mxu0 %v491
    %v572 = vpop.f32.mrf.mxu0
    %v573 = vadd.f32 %v483, %v572
    %v574 = vpop.f32.mrf.mxu0
    %575 = vmatprep.mubr.f32.mxu0 0.0
    %576 = vmatmul.mubr.f32.gmra.mxu0 %v494
    %v577 = vpop.f32.mrf.mxu0
    %v578 = vadd.f32 %v483, %v577
    %v579 = vpop.f32.mrf.mxu0
    %580 = vdwg.mxu0
    %v581 = vmax.f32 %v563, 0.0
    %v582 = vmax.f32 %v568, 0.0
    %v583 = vmax.f32 %v573, 0.0
    %v584 = vmax.f32 %v578, 0.0
    %v585 = vlaneseq
    %v586 = vshrl.u32 %v585, 7
    %v587 = vsub.s32 0, %v586
    %v588 = vrot.slane %v477, %v587
    %v590 = vsel %vm267, %v581, 0
    %v593 = vsel %vm267, %v582, 0
    %v596 = vsel %vm267, %v583, 0
    %v599 = vsel %vm267, %v584, 0
    %601 = vmatprep.subr.mxu0 0.0
    %602 = vmatpush1.msra.mxu0 0.0
    %603 = vmatprep.subr.mxu0 0.0
    %604 = vmatpush1.msra.mxu0 0.0
    %605 = vmatprep.subr.mxu0 0.0
    %606 = vmatpush1.msra.mxu0 0.0
    %607 = vmatprep.subr.mxu0 0.0
    %608 = vmatpush1.msra.mxu0 0.0
    %609 = vmatprep.subr.mxu0 0.0
    %610 = vmatpush1.msra.mxu0 0.0
    %611 = vmatprep.subr.mxu0 0.0
    %612 = vmatpush1.msra.mxu0 0.0
    %613 = vmatprep.subr.mxu0 0.0
    %614 = vmatpush1.msra.mxu0 0.0
    %615 = vmatprep.subr.mxu0 0.0
    %616 = vmatpush1.msra.mxu0 0.0
    %617 = vmatprep.subr.mxu0 0.0
    %618 = vmatpush1.msra.mxu0 0.0
    %619 = vmatprep.subr.mxu0 0.0
    %620 = vmatpush1.msra.mxu0 0.0
    %621 = vmatprep.subr.mxu0 0.0
    %622 = vmatpush1.msra.mxu0 0.0
    %623 = vmatprep.subr.mxu0 0.0
    %624 = vmatpush1.msra.mxu0 0.0
    %625 = vmatprep.subr.mxu0 0.0
    %626 = vmatpush1.msra.mxu0 0.0
    %627 = vmatprep.subr.mxu0 0.0
    %628 = vmatpush1.msra.mxu0 0.0
    %629 = vmatprep.subr.mxu0 0.0
    %630 = vmatpush1.msra.mxu0 %v475
    %631 = vmatprep.subr.mxu0 0.0
    %632 = vmatpush1.msra.mxu0 %v474
    %633 = vmatprep.subr.mxu0 0.0
    %634 = vmatpush2.msra.mxu0 0.0
    %635 = vmatprep.subr.mxu0 0.0
    %636 = vmatpush2.msra.mxu0 0.0
    %637 = vmatprep.subr.mxu0 0.0
    %638 = vmatpush2.msra.mxu0 0.0
    %639 = vmatprep.subr.mxu0 0.0
    %640 = vmatpush2.msra.mxu0 0.0
    %641 = vmatprep.subr.mxu0 0.0
    %642 = vmatpush2.msra.mxu0 0.0
    %643 = vmatprep.subr.mxu0 0.0
    %644 = vmatpush2.msra.mxu0 0.0
    %645 = vmatprep.subr.mxu0 0.0
    %646 = vmatpush2.msra.mxu0 0.0
    %647 = vmatprep.subr.mxu0 0.0
    %648 = vmatpush2.msra.mxu0 0.0
    %649 = vmatprep.subr.mxu0 0.0
    %650 = vmatpush2.msra.mxu0 0.0
    %651 = vmatprep.subr.mxu0 0.0
    %652 = vmatpush2.msra.mxu0 0.0
    %653 = vmatprep.subr.mxu0 0.0
    %654 = vmatpush2.msra.mxu0 0.0
    %655 = vmatprep.subr.mxu0 0.0
    %656 = vmatpush2.msra.mxu0 0.0
    %657 = vmatprep.subr.mxu0 0.0
    %658 = vmatpush2.msra.mxu0 0.0
    %659 = vmatprep.subr.mxu0 0.0
    %660 = vmatpush2.msra.mxu0 0.0
    %661 = vmatprep.subr.mxu0 0.0
    %662 = vmatpush2.msra.mxu0 0.0
    %663 = vmatprep.subr.mxu0 0.0
    %664 = vmatpush2.msra.mxu0 0.0
    %665 = vmatprep.mubr.f32.mxu0 0.0
    %666 = vmatmul.mubr.f32.gmra.mxu0 %v590
    %v667 = vpop.f32.mrf.mxu0
    %v668 = vadd.f32 %v588, %v667
    %v669 = vpop.f32.mrf.mxu0
    %670 = vmatprep.mubr.f32.mxu0 0.0
    %671 = vmatmul.mubr.f32.gmra.mxu0 %v593
    %v672 = vpop.f32.mrf.mxu0
    %v673 = vadd.f32 %v588, %v672
    %v674 = vpop.f32.mrf.mxu0
    %675 = vmatprep.mubr.f32.mxu0 0.0
    %676 = vmatmul.mubr.f32.gmra.mxu0 %v596
    %v677 = vpop.f32.mrf.mxu0
    %v678 = vadd.f32 %v588, %v677
    %v679 = vpop.f32.mrf.mxu0
    %680 = vmatprep.mubr.f32.mxu0 0.0
    %681 = vmatmul.mubr.f32.gmra.mxu0 %v599
    %v682 = vpop.f32.mrf.mxu0
    %v683 = vadd.f32 %v588, %v682
    %v684 = vpop.f32.mrf.mxu0
    %685 = vdwg.mxu0
    %v686 = vmax.f32 %v668, 0.0
    %v687 = vmax.f32 %v673, 0.0
    %v688 = vmax.f32 %v678, 0.0
    %v689 = vmax.f32 %v683, 0.0
    %v690 = vlaneseq
    %v691 = vshrl.u32 %v690, 7
    %v692 = vsub.s32 0, %v691
    %v693 = vrot.slane %v478, %v692
    %v694 = vmul.f32 %v686, %v693
    %v695 = vmul.f32 %v687, %v693
    %v696 = vmul.f32 %v688, %v693
    %v697 = vmul.f32 %v689, %v693
    %v698 = vlaneseq
    %v699 = vshrl.u32 %v698, 7
    %v700 = vsub.s32 0, %v699
    %v701 = vrot.slane %v479, %v700
    %v702 = vadd.f32 %v694, %v701
    %v703 = vadd.f32 %v695, %v701
    %v704 = vadd.f32 %v696, %v701
    %v705 = vadd.f32 %v697, %v701
    %706 = vmatprep.subr.mxu0 0.0
    %707 = vmatpush1.msra.mxu0 0.0
    %708 = vmatprep.subr.mxu0 0.0
    %709 = vmatpush1.msra.mxu0 0.0
    %710 = vmatprep.subr.mxu0 0.0
    %711 = vmatpush1.msra.mxu0 0.0
    %712 = vmatprep.subr.mxu0 0.0
    %713 = vmatpush1.msra.mxu0 0.0
    %714 = vmatprep.subr.mxu0 0.0
    %715 = vmatpush1.msra.mxu0 0.0
    %716 = vmatprep.subr.mxu0 0.0
    %717 = vmatpush1.msra.mxu0 0.0
    %718 = vmatprep.subr.mxu0 0.0
    %719 = vmatpush1.msra.mxu0 0.0
    %720 = vmatprep.subr.mxu0 0.0
    %721 = vmatpush1.msra.mxu0 0.0
    %722 = vmatprep.subr.mxu0 0.0
    %723 = vmatpush1.msra.mxu0 0.0
    %724 = vmatprep.subr.mxu0 0.0
    %725 = vmatpush1.msra.mxu0 0.0
    %726 = vmatprep.subr.mxu0 0.0
    %727 = vmatpush1.msra.mxu0 0.0
    %728 = vmatprep.subr.mxu0 0.0
    %729 = vmatpush1.msra.mxu0 0.0
    %730 = vmatprep.subr.mxu0 0.0
    %731 = vmatpush1.msra.mxu0 %v705
    %732 = vmatprep.subr.mxu0 0.0
    %733 = vmatpush1.msra.mxu0 %v704
    %734 = vmatprep.subr.mxu0 0.0
    %735 = vmatpush1.msra.mxu0 %v703
    %736 = vmatprep.subr.mxu0 0.0
    %737 = vmatpush1.msra.mxu0 %v702
    %738 = vmatprep.subr.mxu0 0.0
    %739 = vmatpush2.msra.mxu0 0.0
    %740 = vmatprep.subr.mxu0 0.0
    %741 = vmatpush2.msra.mxu0 0.0
    %742 = vmatprep.subr.mxu0 0.0
    %743 = vmatpush2.msra.mxu0 0.0
    %744 = vmatprep.subr.mxu0 0.0
    %745 = vmatpush2.msra.mxu0 0.0
    %746 = vmatprep.subr.mxu0 0.0
    %747 = vmatpush2.msra.mxu0 0.0
    %748 = vmatprep.subr.mxu0 0.0
    %749 = vmatpush2.msra.mxu0 0.0
    %750 = vmatprep.subr.mxu0 0.0
    %751 = vmatpush2.msra.mxu0 0.0
    %752 = vmatprep.subr.mxu0 0.0
    %753 = vmatpush2.msra.mxu0 0.0
    %754 = vmatprep.subr.mxu0 0.0
    %755 = vmatpush2.msra.mxu0 0.0
    %756 = vmatprep.subr.mxu0 0.0
    %757 = vmatpush2.msra.mxu0 0.0
    %758 = vmatprep.subr.mxu0 0.0
    %759 = vmatpush2.msra.mxu0 0.0
    %760 = vmatprep.subr.mxu0 0.0
    %761 = vmatpush2.msra.mxu0 0.0
    %762 = vmatprep.subr.mxu0 0.0
    %763 = vmatpush2.msra.mxu0 0.0
    %764 = vmatprep.subr.mxu0 0.0
    %765 = vmatpush2.msra.mxu0 0.0
    %766 = vmatprep.subr.mxu0 0.0
    %767 = vmatpush2.msra.mxu0 0.0
    %768 = vmatprep.subr.mxu0 0.0
    %769 = vmatpush2.msra.mxu0 0.0
    %770 = vmatprep.mubr.f32.mxu0 0.0
    %771 = vmatmul.mubr.f32.gmra.mxu0 %v50
    %v772 = vpop.f32.mrf.mxu0
    %v773 = vadd.f32 0.0, %v772
    %v774 = vpop.f32.mrf.mxu0
    %775 = vmatprep.mubr.f32.mxu0 0.0
    %776 = vmatmul.mubr.f32.gmra.mxu0 %v53
    %v777 = vpop.f32.mrf.mxu0
    %v778 = vadd.f32 0.0, %v777
    %v779 = vpop.f32.mrf.mxu0
    %780 = vmatprep.mubr.f32.mxu0 0.0
    %781 = vmatmul.mubr.f32.gmra.mxu0 %v56
    %v782 = vpop.f32.mrf.mxu0
    %v783 = vadd.f32 0.0, %v782
    %v784 = vpop.f32.mrf.mxu0
    %785 = vmatprep.mubr.f32.mxu0 0.0
    %786 = vmatmul.mubr.f32.gmra.mxu0 %v59
    %v787 = vpop.f32.mrf.mxu0
    %v788 = vadd.f32 0.0, %v787
    %v789 = vpop.f32.mrf.mxu0
    %790 = vdwg.mxu0
    %s791 = scalar_lea.vmem [#allocation2], 48
    %v792 = vld [vmem:[%s791] sm:$0xff]
    %v793 = vld [vmem:[%s791 + $0x8] sm:$0xff]
    %s794 = scalar_lea.vmem [#allocation2], 64
    %v795 = vld [vmem:[%s794] sm:$0xff]
    %v796 = vld [vmem:[%s794 + $0x8] sm:$0xff]
    %v797 = vld [vmem:[%s4 + $0x8] sm:$0x1]
    %v798 = vld [vmem:[%s4 + $0x9] sm:$0x1]
    %v799 = vld [vmem:[%s4 + $0xa] sm:$0x1]
    %v800 = vld [vmem:[%s4 + $0xb] sm:$0x1]
    %v801 = vlaneseq
    %v802 = vshrl.u32 %v801, 7
    %v803 = vsub.s32 0, %v802
    %v804 = vrot.slane %v797, %v803
    %v806 = vsel %vm267, %v773, 0
    %v809 = vsel %vm267, %v778, 0
    %v812 = vsel %vm267, %v783, 0
    %v815 = vsel %vm267, %v788, 0
    %817 = vmatprep.subr.mxu0 0.0
    %818 = vmatpush1.msra.mxu0 0.0
    %819 = vmatprep.subr.mxu0 0.0
    %820 = vmatpush1.msra.mxu0 0.0
    %821 = vmatprep.subr.mxu0 0.0
    %822 = vmatpush1.msra.mxu0 0.0
    %823 = vmatprep.subr.mxu0 0.0
    %824 = vmatpush1.msra.mxu0 0.0
    %825 = vmatprep.subr.mxu0 0.0
    %826 = vmatpush1.msra.mxu0 0.0
    %827 = vmatprep.subr.mxu0 0.0
    %828 = vmatpush1.msra.mxu0 0.0
    %829 = vmatprep.subr.mxu0 0.0
    %830 = vmatpush1.msra.mxu0 0.0
    %831 = vmatprep.subr.mxu0 0.0
    %832 = vmatpush1.msra.mxu0 0.0
    %833 = vmatprep.subr.mxu0 0.0
    %834 = vmatpush1.msra.mxu0 0.0
    %835 = vmatprep.subr.mxu0 0.0
    %836 = vmatpush1.msra.mxu0 0.0
    %837 = vmatprep.subr.mxu0 0.0
    %838 = vmatpush1.msra.mxu0 0.0
    %839 = vmatprep.subr.mxu0 0.0
    %840 = vmatpush1.msra.mxu0 0.0
    %841 = vmatprep.subr.mxu0 0.0
    %842 = vmatpush1.msra.mxu0 0.0
    %843 = vmatprep.subr.mxu0 0.0
    %844 = vmatpush1.msra.mxu0 0.0
    %845 = vmatprep.subr.mxu0 0.0
    %846 = vmatpush1.msra.mxu0 %v793
    %847 = vmatprep.subr.mxu0 0.0
    %848 = vmatpush1.msra.mxu0 %v792
    %849 = vmatprep.subr.mxu0 0.0
    %850 = vmatpush2.msra.mxu0 0.0
    %851 = vmatprep.subr.mxu0 0.0
    %852 = vmatpush2.msra.mxu0 0.0
    %853 = vmatprep.subr.mxu0 0.0
    %854 = vmatpush2.msra.mxu0 0.0
    %855 = vmatprep.subr.mxu0 0.0
    %856 = vmatpush2.msra.mxu0 0.0
    %857 = vmatprep.subr.mxu0 0.0
    %858 = vmatpush2.msra.mxu0 0.0
    %859 = vmatprep.subr.mxu0 0.0
    %860 = vmatpush2.msra.mxu0 0.0
    %861 = vmatprep.subr.mxu0 0.0
    %862 = vmatpush2.msra.mxu0 0.0
    %863 = vmatprep.subr.mxu0 0.0
    %864 = vmatpush2.msra.mxu0 0.0
    %865 = vmatprep.subr.mxu0 0.0
    %866 = vmatpush2.msra.mxu0 0.0
    %867 = vmatprep.subr.mxu0 0.0
    %868 = vmatpush2.msra.mxu0 0.0
    %869 = vmatprep.subr.mxu0 0.0
    %870 = vmatpush2.msra.mxu0 0.0
    %871 = vmatprep.subr.mxu0 0.0
    %872 = vmatpush2.msra.mxu0 0.0
    %873 = vmatprep.subr.mxu0 0.0
    %874 = vmatpush2.msra.mxu0 0.0
    %875 = vmatprep.subr.mxu0 0.0
    %876 = vmatpush2.msra.mxu0 0.0
    %877 = vmatprep.subr.mxu0 0.0
    %878 = vmatpush2.msra.mxu0 0.0
    %879 = vmatprep.subr.mxu0 0.0
    %880 = vmatpush2.msra.mxu0 0.0
    %881 = vmatprep.mubr.f32.mxu0 0.0
    %882 = vmatmul.mubr.f32.gmra.mxu0 %v806
    %v883 = vpop.f32.mrf.mxu0
    %v884 = vadd.f32 %v804, %v883
    %v885 = vpop.f32.mrf.mxu0
    %886 = vmatprep.mubr.f32.mxu0 0.0
    %887 = vmatmul.mubr.f32.gmra.mxu0 %v809
    %v888 = vpop.f32.mrf.mxu0
    %v889 = vadd.f32 %v804, %v888
    %v890 = vpop.f32.mrf.mxu0
    %891 = vmatprep.mubr.f32.mxu0 0.0
    %892 = vmatmul.mubr.f32.gmra.mxu0 %v812
    %v893 = vpop.f32.mrf.mxu0
    %v894 = vadd.f32 %v804, %v893
    %v895 = vpop.f32.mrf.mxu0
    %896 = vmatprep.mubr.f32.mxu0 0.0
    %897 = vmatmul.mubr.f32.gmra.mxu0 %v815
    %v898 = vpop.f32.mrf.mxu0
    %v899 = vadd.f32 %v804, %v898
    %v900 = vpop.f32.mrf.mxu0
    %901 = vdwg.mxu0
    %v902 = vmax.f32 %v884, 0.0
    %v903 = vmax.f32 %v889, 0.0
    %v904 = vmax.f32 %v894, 0.0
    %v905 = vmax.f32 %v899, 0.0
    %v906 = vlaneseq
    %v907 = vshrl.u32 %v906, 7
    %v908 = vsub.s32 0, %v907
    %v909 = vrot.slane %v798, %v908
    %v911 = vsel %vm267, %v902, 0
    %v914 = vsel %vm267, %v903, 0
    %v917 = vsel %vm267, %v904, 0
    %v920 = vsel %vm267, %v905, 0
    %922 = vmatprep.subr.mxu0 0.0
    %923 = vmatpush1.msra.mxu0 0.0
    %924 = vmatprep.subr.mxu0 0.0
    %925 = vmatpush1.msra.mxu0 0.0
    %926 = vmatprep.subr.mxu0 0.0
    %927 = vmatpush1.msra.mxu0 0.0
    %928 = vmatprep.subr.mxu0 0.0
    %929 = vmatpush1.msra.mxu0 0.0
    %930 = vmatprep.subr.mxu0 0.0
    %931 = vmatpush1.msra.mxu0 0.0
    %932 = vmatprep.subr.mxu0 0.0
    %933 = vmatpush1.msra.mxu0 0.0
    %934 = vmatprep.subr.mxu0 0.0
    %935 = vmatpush1.msra.mxu0 0.0
    %936 = vmatprep.subr.mxu0 0.0
    %937 = vmatpush1.msra.mxu0 0.0
    %938 = vmatprep.subr.mxu0 0.0
    %939 = vmatpush1.msra.mxu0 0.0
    %940 = vmatprep.subr.mxu0 0.0
    %941 = vmatpush1.msra.mxu0 0.0
    %942 = vmatprep.subr.mxu0 0.0
    %943 = vmatpush1.msra.mxu0 0.0
    %944 = vmatprep.subr.mxu0 0.0
    %945 = vmatpush1.msra.mxu0 0.0
    %946 = vmatprep.subr.mxu0 0.0
    %947 = vmatpush1.msra.mxu0 0.0
    %948 = vmatprep.subr.mxu0 0.0
    %949 = vmatpush1.msra.mxu0 0.0
    %950 = vmatprep.subr.mxu0 0.0
    %951 = vmatpush1.msra.mxu0 %v796
    %952 = vmatprep.subr.mxu0 0.0
    %953 = vmatpush1.msra.mxu0 %v795
    %954 = vmatprep.subr.mxu0 0.0
    %955 = vmatpush2.msra.mxu0 0.0
    %956 = vmatprep.subr.mxu0 0.0
    %957 = vmatpush2.msra.mxu0 0.0
    %958 = vmatprep.subr.mxu0 0.0
    %959 = vmatpush2.msra.mxu0 0.0
    %960 = vmatprep.subr.mxu0 0.0
    %961 = vmatpush2.msra.mxu0 0.0
    %962 = vmatprep.subr.mxu0 0.0
    %963 = vmatpush2.msra.mxu0 0.0
    %964 = vmatprep.subr.mxu0 0.0
    %965 = vmatpush2.msra.mxu0 0.0
    %966 = vmatprep.subr.mxu0 0.0
    %967 = vmatpush2.msra.mxu0 0.0
    %968 = vmatprep.subr.mxu0 0.0
    %969 = vmatpush2.msra.mxu0 0.0
    %970 = vmatprep.subr.mxu0 0.0
    %971 = vmatpush2.msra.mxu0 0.0
    %972 = vmatprep.subr.mxu0 0.0
    %973 = vmatpush2.msra.mxu0 0.0
    %974 = vmatprep.subr.mxu0 0.0
    %975 = vmatpush2.msra.mxu0 0.0
    %976 = vmatprep.subr.mxu0 0.0
    %977 = vmatpush2.msra.mxu0 0.0
    %978 = vmatprep.subr.mxu0 0.0
    %979 = vmatpush2.msra.mxu0 0.0
    %980 = vmatprep.subr.mxu0 0.0
    %981 = vmatpush2.msra.mxu0 0.0
    %982 = vmatprep.subr.mxu0 0.0
    %983 = vmatpush2.msra.mxu0 0.0
    %984 = vmatprep.subr.mxu0 0.0
    %985 = vmatpush2.msra.mxu0 0.0
    %986 = vmatprep.mubr.f32.mxu0 0.0
    %987 = vmatmul.mubr.f32.gmra.mxu0 %v911
    %v988 = vpop.f32.mrf.mxu0
    %v989 = vadd.f32 %v909, %v988
    %v990 = vpop.f32.mrf.mxu0
    %991 = vmatprep.mubr.f32.mxu0 0.0
    %992 = vmatmul.mubr.f32.gmra.mxu0 %v914
    %v993 = vpop.f32.mrf.mxu0
    %v994 = vadd.f32 %v909, %v993
    %v995 = vpop.f32.mrf.mxu0
    %996 = vmatprep.mubr.f32.mxu0 0.0
    %997 = vmatmul.mubr.f32.gmra.mxu0 %v917
    %v998 = vpop.f32.mrf.mxu0
    %v999 = vadd.f32 %v909, %v998
    %v1000 = vpop.f32.mrf.mxu0
    %1001 = vmatprep.mubr.f32.mxu0 0.0
    %1002 = vmatmul.mubr.f32.gmra.mxu0 %v920
    %v1003 = vpop.f32.mrf.mxu0
    %v1004 = vadd.f32 %v909, %v1003
    %v1005 = vpop.f32.mrf.mxu0
    %1006 = vdwg.mxu0
    %v1007 = vmax.f32 %v989, 0.0
    %v1008 = vmax.f32 %v994, 0.0
    %v1009 = vmax.f32 %v999, 0.0
    %v1010 = vmax.f32 %v1004, 0.0
    %v1011 = vlaneseq
    %v1012 = vshrl.u32 %v1011, 7
    %v1013 = vsub.s32 0, %v1012
    %v1014 = vrot.slane %v799, %v1013
    %v1015 = vmul.f32 %v1007, %v1014
    %v1016 = vmul.f32 %v1008, %v1014
    %v1017 = vmul.f32 %v1009, %v1014
    %v1018 = vmul.f32 %v1010, %v1014
    %v1019 = vlaneseq
    %v1020 = vshrl.u32 %v1019, 7
    %v1021 = vsub.s32 0, %v1020
    %v1022 = vrot.slane %v800, %v1021
    %v1023 = vadd.f32 %v1015, %v1022
    %v1024 = vadd.f32 %v1016, %v1022
    %v1025 = vadd.f32 %v1017, %v1022
    %v1026 = vadd.f32 %v1018, %v1022
    %1027 = vmatprep.subr.mxu0 0.0
    %1028 = vmatpush1.msra.mxu0 0.0
    %1029 = vmatprep.subr.mxu0 0.0
    %1030 = vmatpush1.msra.mxu0 0.0
    %1031 = vmatprep.subr.mxu0 0.0
    %1032 = vmatpush1.msra.mxu0 0.0
    %1033 = vmatprep.subr.mxu0 0.0
    %1034 = vmatpush1.msra.mxu0 0.0
    %1035 = vmatprep.subr.mxu0 0.0
    %1036 = vmatpush1.msra.mxu0 0.0
    %1037 = vmatprep.subr.mxu0 0.0
    %1038 = vmatpush1.msra.mxu0 0.0
    %1039 = vmatprep.subr.mxu0 0.0
    %1040 = vmatpush1.msra.mxu0 0.0
    %1041 = vmatprep.subr.mxu0 0.0
    %1042 = vmatpush1.msra.mxu0 0.0
    %1043 = vmatprep.subr.mxu0 0.0
    %1044 = vmatpush1.msra.mxu0 0.0
    %1045 = vmatprep.subr.mxu0 0.0
    %1046 = vmatpush1.msra.mxu0 0.0
    %1047 = vmatprep.subr.mxu0 0.0
    %1048 = vmatpush1.msra.mxu0 0.0
    %1049 = vmatprep.subr.mxu0 0.0
    %1050 = vmatpush1.msra.mxu0 0.0
    %1051 = vmatprep.subr.mxu0 0.0
    %1052 = vmatpush1.msra.mxu0 %v1026
    %1053 = vmatprep.subr.mxu0 0.0
    %1054 = vmatpush1.msra.mxu0 %v1025
    %1055 = vmatprep.subr.mxu0 0.0
    %1056 = vmatpush1.msra.mxu0 %v1024
    %1057 = vmatprep.subr.mxu0 0.0
    %1058 = vmatpush1.msra.mxu0 %v1023
    %1059 = vmatprep.subr.mxu0 0.0
    %1060 = vmatpush2.msra.mxu0 0.0
    %1061 = vmatprep.subr.mxu0 0.0
    %1062 = vmatpush2.msra.mxu0 0.0
    %1063 = vmatprep.subr.mxu0 0.0
    %1064 = vmatpush2.msra.mxu0 0.0
    %1065 = vmatprep.subr.mxu0 0.0
    %1066 = vmatpush2.msra.mxu0 0.0
    %1067 = vmatprep.subr.mxu0 0.0
    %1068 = vmatpush2.msra.mxu0 0.0
    %1069 = vmatprep.subr.mxu0 0.0
    %1070 = vmatpush2.msra.mxu0 0.0
    %1071 = vmatprep.subr.mxu0 0.0
    %1072 = vmatpush2.msra.mxu0 0.0
    %1073 = vmatprep.subr.mxu0 0.0
    %1074 = vmatpush2.msra.mxu0 0.0
    %1075 = vmatprep.subr.mxu0 0.0
    %1076 = vmatpush2.msra.mxu0 0.0
    %1077 = vmatprep.subr.mxu0 0.0
    %1078 = vmatpush2.msra.mxu0 0.0
    %1079 = vmatprep.subr.mxu0 0.0
    %1080 = vmatpush2.msra.mxu0 0.0
    %1081 = vmatprep.subr.mxu0 0.0
    %1082 = vmatpush2.msra.mxu0 0.0
    %1083 = vmatprep.subr.mxu0 0.0
    %1084 = vmatpush2.msra.mxu0 0.0
    %1085 = vmatprep.subr.mxu0 0.0
    %1086 = vmatpush2.msra.mxu0 0.0
    %1087 = vmatprep.subr.mxu0 0.0
    %1088 = vmatpush2.msra.mxu0 0.0
    %1089 = vmatprep.subr.mxu0 0.0
    %1090 = vmatpush2.msra.mxu0 0.0
    %1091 = vmatprep.mubr.f32.mxu0 0.0
    %1092 = vmatmul.mubr.f32.gmra.mxu0 %v50
    %v1093 = vpop.f32.mrf.mxu0
    %v1094 = vadd.f32 0.0, %v1093
    %v1095 = vpop.f32.mrf.mxu0
    %1096 = vmatprep.mubr.f32.mxu0 0.0
    %1097 = vmatmul.mubr.f32.gmra.mxu0 %v53
    %v1098 = vpop.f32.mrf.mxu0
    %v1099 = vadd.f32 0.0, %v1098
    %v1100 = vpop.f32.mrf.mxu0
    %1101 = vmatprep.mubr.f32.mxu0 0.0
    %1102 = vmatmul.mubr.f32.gmra.mxu0 %v56
    %v1103 = vpop.f32.mrf.mxu0
    %v1104 = vadd.f32 0.0, %v1103
    %v1105 = vpop.f32.mrf.mxu0
    %1106 = vmatprep.mubr.f32.mxu0 0.0
    %1107 = vmatmul.mubr.f32.gmra.mxu0 %v59
    %v1108 = vpop.f32.mrf.mxu0
    %v1109 = vadd.f32 0.0, %v1108
    %v1110 = vpop.f32.mrf.mxu0
    %1111 = vdwg.mxu0
    %s1112 = scalar_lea.vmem [#allocation2], 80
    %v1113 = vld [vmem:[%s1112] sm:$0xff]
    %v1114 = vld [vmem:[%s1112 + $0x8] sm:$0xff]
    %s1115 = scalar_lea.vmem [#allocation2], 96
    %v1116 = vld [vmem:[%s1115] sm:$0xff]
    %v1117 = vld [vmem:[%s1115 + $0x8] sm:$0xff]
    %v1118 = vld [vmem:[%s4 + $0xc] sm:$0x1]
    %v1119 = vld [vmem:[%s4 + $0xd] sm:$0x1]
    %v1120 = vld [vmem:[%s4 + $0xe] sm:$0x1]
    %v1121 = vld [vmem:[%s4 + $0xf] sm:$0x1]
    %v1122 = vlaneseq
    %v1123 = vshrl.u32 %v1122, 7
    %v1124 = vsub.s32 0, %v1123
    %v1125 = vrot.slane %v1118, %v1124
    %v1127 = vsel %vm267, %v1094, 0
    %v1130 = vsel %vm267, %v1099, 0
    %v1133 = vsel %vm267, %v1104, 0
    %v1136 = vsel %vm267, %v1109, 0
    %1138 = vmatprep.subr.mxu0 0.0
    %1139 = vmatpush1.msra.mxu0 0.0
    %1140 = vmatprep.subr.mxu0 0.0
    %1141 = vmatpush1.msra.mxu0 0.0
    %1142 = vmatprep.subr.mxu0 0.0
    %1143 = vmatpush1.msra.mxu0 0.0
    %1144 = vmatprep.subr.mxu0 0.0
    %1145 = vmatpush1.msra.mxu0 0.0
    %1146 = vmatprep.subr.mxu0 0.0
    %1147 = vmatpush1.msra.mxu0 0.0
    %1148 = vmatprep.subr.mxu0 0.0
    %1149 = vmatpush1.msra.mxu0 0.0
    %1150 = vmatprep.subr.mxu0 0.0
    %1151 = vmatpush1.msra.mxu0 0.0
    %1152 = vmatprep.subr.mxu0 0.0
    %1153 = vmatpush1.msra.mxu0 0.0
    %1154 = vmatprep.subr.mxu0 0.0
    %1155 = vmatpush1.msra.mxu0 0.0
    %1156 = vmatprep.subr.mxu0 0.0
    %1157 = vmatpush1.msra.mxu0 0.0
    %1158 = vmatprep.subr.mxu0 0.0
    %1159 = vmatpush1.msra.mxu0 0.0
    %1160 = vmatprep.subr.mxu0 0.0
    %1161 = vmatpush1.msra.mxu0 0.0
    %1162 = vmatprep.subr.mxu0 0.0
    %1163 = vmatpush1.msra.mxu0 0.0
    %1164 = vmatprep.subr.mxu0 0.0
    %1165 = vmatpush1.msra.mxu0 0.0
    %1166 = vmatprep.subr.mxu0 0.0
    %1167 = vmatpush1.msra.mxu0 %v1114
    %1168 = vmatprep.subr.mxu0 0.0
    %1169 = vmatpush1.msra.mxu0 %v1113
    %1170 = vmatprep.subr.mxu0 0.0
    %1171 = vmatpush2.msra.mxu0 0.0
    %1172 = vmatprep.subr.mxu0 0.0
    %1173 = vmatpush2.msra.mxu0 0.0
    %1174 = vmatprep.subr.mxu0 0.0
    %1175 = vmatpush2.msra.mxu0 0.0
    %1176 = vmatprep.subr.mxu0 0.0
    %1177 = vmatpush2.msra.mxu0 0.0
    %1178 = vmatprep.subr.mxu0 0.0
    %1179 = vmatpush2.msra.mxu0 0.0
    %1180 = vmatprep.subr.mxu0 0.0
    %1181 = vmatpush2.msra.mxu0 0.0
    %1182 = vmatprep.subr.mxu0 0.0
    %1183 = vmatpush2.msra.mxu0 0.0
    %1184 = vmatprep.subr.mxu0 0.0
    %1185 = vmatpush2.msra.mxu0 0.0
    %1186 = vmatprep.subr.mxu0 0.0
    %1187 = vmatpush2.msra.mxu0 0.0
    %1188 = vmatprep.subr.mxu0 0.0
    %1189 = vmatpush2.msra.mxu0 0.0
    %1190 = vmatprep.subr.mxu0 0.0
    %1191 = vmatpush2.msra.mxu0 0.0
    %1192 = vmatprep.subr.mxu0 0.0
    %1193 = vmatpush2.msra.mxu0 0.0
    %1194 = vmatprep.subr.mxu0 0.0
    %1195 = vmatpush2.msra.mxu0 0.0
    %1196 = vmatprep.subr.mxu0 0.0
    %1197 = vmatpush2.msra.mxu0 0.0
    %1198 = vmatprep.subr.mxu0 0.0
    %1199 = vmatpush2.msra.mxu0 0.0
    %1200 = vmatprep.subr.mxu0 0.0
    %1201 = vmatpush2.msra.mxu0 0.0
    %1202 = vmatprep.mubr.f32.mxu0 0.0
    %1203 = vmatmul.mubr.f32.gmra.mxu0 %v1127
    %v1204 = vpop.f32.mrf.mxu0
    %v1205 = vadd.f32 %v1125, %v1204
    %v1206 = vpop.f32.mrf.mxu0
    %1207 = vmatprep.mubr.f32.mxu0 0.0
    %1208 = vmatmul.mubr.f32.gmra.mxu0 %v1130
    %v1209 = vpop.f32.mrf.mxu0
    %v1210 = vadd.f32 %v1125, %v1209
    %v1211 = vpop.f32.mrf.mxu0
    %1212 = vmatprep.mubr.f32.mxu0 0.0
    %1213 = vmatmul.mubr.f32.gmra.mxu0 %v1133
    %v1214 = vpop.f32.mrf.mxu0
    %v1215 = vadd.f32 %v1125, %v1214
    %v1216 = vpop.f32.mrf.mxu0
    %1217 = vmatprep.mubr.f32.mxu0 0.0
    %1218 = vmatmul.mubr.f32.gmra.mxu0 %v1136
    %v1219 = vpop.f32.mrf.mxu0
    %v1220 = vadd.f32 %v1125, %v1219
    %v1221 = vpop.f32.mrf.mxu0
    %1222 = vdwg.mxu0
    %v1223 = vmax.f32 %v1205, 0.0
    %v1224 = vmax.f32 %v1210, 0.0
    %v1225 = vmax.f32 %v1215, 0.0
    %v1226 = vmax.f32 %v1220, 0.0
    %v1227 = vlaneseq
    %v1228 = vshrl.u32 %v1227, 7
    %v1229 = vsub.s32 0, %v1228
    %v1230 = vrot.slane %v1119, %v1229
    %v1232 = vsel %vm267, %v1223, 0
    %v1235 = vsel %vm267, %v1224, 0
    %v1238 = vsel %vm267, %v1225, 0
    %v1241 = vsel %vm267, %v1226, 0
    %1243 = vmatprep.subr.mxu0 0.0
    %1244 = vmatpush1.msra.mxu0 0.0
    %1245 = vmatprep.subr.mxu0 0.0
    %1246 = vmatpush1.msra.mxu0 0.0
    %1247 = vmatprep.subr.mxu0 0.0
    %1248 = vmatpush1.msra.mxu0 0.0
    %1249 = vmatprep.subr.mxu0 0.0
    %1250 = vmatpush1.msra.mxu0 0.0
    %1251 = vmatprep.subr.mxu0 0.0
    %1252 = vmatpush1.msra.mxu0 0.0
    %1253 = vmatprep.subr.mxu0 0.0
    %1254 = vmatpush1.msra.mxu0 0.0
    %1255 = vmatprep.subr.mxu0 0.0
    %1256 = vmatpush1.msra.mxu0 0.0
    %1257 = vmatprep.subr.mxu0 0.0
    %1258 = vmatpush1.msra.mxu0 0.0
    %1259 = vmatprep.subr.mxu0 0.0
    %1260 = vmatpush1.msra.mxu0 0.0
    %1261 = vmatprep.subr.mxu0 0.0
    %1262 = vmatpush1.msra.mxu0 0.0
    %1263 = vmatprep.subr.mxu0 0.0
    %1264 = vmatpush1.msra.mxu0 0.0
    %1265 = vmatprep.subr.mxu0 0.0
    %1266 = vmatpush1.msra.mxu0 0.0
    %1267 = vmatprep.subr.mxu0 0.0
    %1268 = vmatpush1.msra.mxu0 0.0
    %1269 = vmatprep.subr.mxu0 0.0
    %1270 = vmatpush1.msra.mxu0 0.0
    %1271 = vmatprep.subr.mxu0 0.0
    %1272 = vmatpush1.msra.mxu0 %v1117
    %1273 = vmatprep.subr.mxu0 0.0
    %1274 = vmatpush1.msra.mxu0 %v1116
    %1275 = vmatprep.subr.mxu0 0.0
    %1276 = vmatpush2.msra.mxu0 0.0
    %1277 = vmatprep.subr.mxu0 0.0
    %1278 = vmatpush2.msra.mxu0 0.0
    %1279 = vmatprep.subr.mxu0 0.0
    %1280 = vmatpush2.msra.mxu0 0.0
    %1281 = vmatprep.subr.mxu0 0.0
    %1282 = vmatpush2.msra.mxu0 0.0
    %1283 = vmatprep.subr.mxu0 0.0
    %1284 = vmatpush2.msra.mxu0 0.0
    %1285 = vmatprep.subr.mxu0 0.0
    %1286 = vmatpush2.msra.mxu0 0.0
    %1287 = vmatprep.subr.mxu0 0.0
    %1288 = vmatpush2.msra.mxu0 0.0
    %1289 = vmatprep.subr.mxu0 0.0
    %1290 = vmatpush2.msra.mxu0 0.0
    %1291 = vmatprep.subr.mxu0 0.0
    %1292 = vmatpush2.msra.mxu0 0.0
    %1293 = vmatprep.subr.mxu0 0.0
    %1294 = vmatpush2.msra.mxu0 0.0
    %1295 = vmatprep.subr.mxu0 0.0
    %1296 = vmatpush2.msra.mxu0 0.0
    %1297 = vmatprep.subr.mxu0 0.0
    %1298 = vmatpush2.msra.mxu0 0.0
    %1299 = vmatprep.subr.mxu0 0.0
    %1300 = vmatpush2.msra.mxu0 0.0
    %1301 = vmatprep.subr.mxu0 0.0
    %1302 = vmatpush2.msra.mxu0 0.0
    %1303 = vmatprep.subr.mxu0 0.0
    %1304 = vmatpush2.msra.mxu0 0.0
    %1305 = vmatprep.subr.mxu0 0.0
    %1306 = vmatpush2.msra.mxu0 0.0
    %1307 = vmatprep.mubr.f32.mxu0 0.0
    %1308 = vmatmul.mubr.f32.gmra.mxu0 %v1232
    %v1309 = vpop.f32.mrf.mxu0
    %v1310 = vadd.f32 %v1230, %v1309
    %v1311 = vpop.f32.mrf.mxu0
    %1312 = vmatprep.mubr.f32.mxu0 0.0
    %1313 = vmatmul.mubr.f32.gmra.mxu0 %v1235
    %v1314 = vpop.f32.mrf.mxu0
    %v1315 = vadd.f32 %v1230, %v1314
    %v1316 = vpop.f32.mrf.mxu0
    %1317 = vmatprep.mubr.f32.mxu0 0.0
    %1318 = vmatmul.mubr.f32.gmra.mxu0 %v1238
    %v1319 = vpop.f32.mrf.mxu0
    %v1320 = vadd.f32 %v1230, %v1319
    %v1321 = vpop.f32.mrf.mxu0
    %1322 = vmatprep.mubr.f32.mxu0 0.0
    %1323 = vmatmul.mubr.f32.gmra.mxu0 %v1241
    %v1324 = vpop.f32.mrf.mxu0
    %v1325 = vadd.f32 %v1230, %v1324
    %v1326 = vpop.f32.mrf.mxu0
    %1327 = vdwg.mxu0
    %v1328 = vmax.f32 %v1310, 0.0
    %v1329 = vmax.f32 %v1315, 0.0
    %v1330 = vmax.f32 %v1320, 0.0
    %v1331 = vmax.f32 %v1325, 0.0
    %v1332 = vlaneseq
    %v1333 = vshrl.u32 %v1332, 7
    %v1334 = vsub.s32 0, %v1333
    %v1335 = vrot.slane %v1120, %v1334
    %v1336 = vmul.f32 %v1328, %v1335
    %v1337 = vmul.f32 %v1329, %v1335
    %v1338 = vmul.f32 %v1330, %v1335
    %v1339 = vmul.f32 %v1331, %v1335
    %v1340 = vlaneseq
    %v1341 = vshrl.u32 %v1340, 7
    %v1342 = vsub.s32 0, %v1341
    %v1343 = vrot.slane %v1121, %v1342
    %v1344 = vadd.f32 %v1336, %v1343
    %v1345 = vadd.f32 %v1337, %v1343
    %v1346 = vadd.f32 %v1338, %v1343
    %v1347 = vadd.f32 %v1339, %v1343
    %1348 = vmatprep.subr.mxu0 0.0
    %1349 = vmatpush1.msra.mxu0 0.0
    %1350 = vmatprep.subr.mxu0 0.0
    %1351 = vmatpush1.msra.mxu0 0.0
    %1352 = vmatprep.subr.mxu0 0.0
    %1353 = vmatpush1.msra.mxu0 0.0
    %1354 = vmatprep.subr.mxu0 0.0
    %1355 = vmatpush1.msra.mxu0 0.0
    %1356 = vmatprep.subr.mxu0 0.0
    %1357 = vmatpush1.msra.mxu0 0.0
    %1358 = vmatprep.subr.mxu0 0.0
    %1359 = vmatpush1.msra.mxu0 0.0
    %1360 = vmatprep.subr.mxu0 0.0
    %1361 = vmatpush1.msra.mxu0 0.0
    %1362 = vmatprep.subr.mxu0 0.0
    %1363 = vmatpush1.msra.mxu0 0.0
    %1364 = vmatprep.subr.mxu0 0.0
    %1365 = vmatpush1.msra.mxu0 0.0
    %1366 = vmatprep.subr.mxu0 0.0
    %1367 = vmatpush1.msra.mxu0 0.0
    %1368 = vmatprep.subr.mxu0 0.0
    %1369 = vmatpush1.msra.mxu0 0.0
    %1370 = vmatprep.subr.mxu0 0.0
    %1371 = vmatpush1.msra.mxu0 0.0
    %1372 = vmatprep.subr.mxu0 0.0
    %1373 = vmatpush1.msra.mxu0 %v1347
    %1374 = vmatprep.subr.mxu0 0.0
    %1375 = vmatpush1.msra.mxu0 %v1346
    %1376 = vmatprep.subr.mxu0 0.0
    %1377 = vmatpush1.msra.mxu0 %v1345
    %1378 = vmatprep.subr.mxu0 0.0
    %1379 = vmatpush1.msra.mxu0 %v1344
    %1380 = vmatprep.subr.mxu0 0.0
    %1381 = vmatpush2.msra.mxu0 0.0
    %1382 = vmatprep.subr.mxu0 0.0
    %1383 = vmatpush2.msra.mxu0 0.0
    %1384 = vmatprep.subr.mxu0 0.0
    %1385 = vmatpush2.msra.mxu0 0.0
    %1386 = vmatprep.subr.mxu0 0.0
    %1387 = vmatpush2.msra.mxu0 0.0
    %1388 = vmatprep.subr.mxu0 0.0
    %1389 = vmatpush2.msra.mxu0 0.0
    %1390 = vmatprep.subr.mxu0 0.0
    %1391 = vmatpush2.msra.mxu0 0.0
    %1392 = vmatprep.subr.mxu0 0.0
    %1393 = vmatpush2.msra.mxu0 0.0
    %1394 = vmatprep.subr.mxu0 0.0
    %1395 = vmatpush2.msra.mxu0 0.0
    %1396 = vmatprep.subr.mxu0 0.0
    %1397 = vmatpush2.msra.mxu0 0.0
    %1398 = vmatprep.subr.mxu0 0.0
    %1399 = vmatpush2.msra.mxu0 0.0
    %1400 = vmatprep.subr.mxu0 0.0
    %1401 = vmatpush2.msra.mxu0 0.0
    %1402 = vmatprep.subr.mxu0 0.0
    %1403 = vmatpush2.msra.mxu0 0.0
    %1404 = vmatprep.subr.mxu0 0.0
    %1405 = vmatpush2.msra.mxu0 0.0
    %1406 = vmatprep.subr.mxu0 0.0
    %1407 = vmatpush2.msra.mxu0 0.0
    %1408 = vmatprep.subr.mxu0 0.0
    %1409 = vmatpush2.msra.mxu0 0.0
    %1410 = vmatprep.subr.mxu0 0.0
    %1411 = vmatpush2.msra.mxu0 0.0
    %1412 = vmatprep.mubr.f32.mxu0 0.0
    %1413 = vmatmul.mubr.f32.gmra.mxu0 %v50
    %v1414 = vpop.f32.mrf.mxu0
    %v1415 = vadd.f32 0.0, %v1414
    %v1416 = vpop.f32.mrf.mxu0
    %1417 = vmatprep.mubr.f32.mxu0 0.0
    %1418 = vmatmul.mubr.f32.gmra.mxu0 %v53
    %v1419 = vpop.f32.mrf.mxu0
    %v1420 = vadd.f32 0.0, %v1419
    %v1421 = vpop.f32.mrf.mxu0
    %1422 = vmatprep.mubr.f32.mxu0 0.0
    %1423 = vmatmul.mubr.f32.gmra.mxu0 %v56
    %v1424 = vpop.f32.mrf.mxu0
    %v1425 = vadd.f32 0.0, %v1424
    %v1426 = vpop.f32.mrf.mxu0
    %1427 = vmatprep.mubr.f32.mxu0 0.0
    %1428 = vmatmul.mubr.f32.gmra.mxu0 %v59
    %v1429 = vpop.f32.mrf.mxu0
    %v1430 = vadd.f32 0.0, %v1429
    %v1431 = vpop.f32.mrf.mxu0
    %1432 = vdwg.mxu0
    %s1433 = scalar_lea.vmem [#allocation2], 112
    %v1434 = vld [vmem:[%s1433] sm:$0xff]
    %v1435 = vld [vmem:[%s1433 + $0x8] sm:$0xff]
    %s1436 = scalar_lea.vmem [#allocation2], 128
    %v1437 = vld [vmem:[%s1436] sm:$0xff]
    %v1438 = vld [vmem:[%s1436 + $0x8] sm:$0xff]
    %v1439 = vld [vmem:[%s4 + $0x10] sm:$0x1]
    %v1440 = vld [vmem:[%s4 + $0x11] sm:$0x1]
    %v1441 = vld [vmem:[%s4 + $0x12] sm:$0x1]
    %v1442 = vld [vmem:[%s4 + $0x13] sm:$0x1]
    %v1443 = vlaneseq
    %v1444 = vshrl.u32 %v1443, 7
    %v1445 = vsub.s32 0, %v1444
    %v1446 = vrot.slane %v1439, %v1445
    %v1448 = vsel %vm267, %v1415, 0
    %v1451 = vsel %vm267, %v1420, 0
    %v1454 = vsel %vm267, %v1425, 0
    %v1457 = vsel %vm267, %v1430, 0
    %1459 = vmatprep.subr.mxu0 0.0
    %1460 = vmatpush1.msra.mxu0 0.0
    %1461 = vmatprep.subr.mxu0 0.0
    %1462 = vmatpush1.msra.mxu0 0.0
    %1463 = vmatprep.subr.mxu0 0.0
    %1464 = vmatpush1.msra.mxu0 0.0
    %1465 = vmatprep.subr.mxu0 0.0
    %1466 = vmatpush1.msra.mxu0 0.0
    %1467 = vmatprep.subr.mxu0 0.0
    %1468 = vmatpush1.msra.mxu0 0.0
    %1469 = vmatprep.subr.mxu0 0.0
    %1470 = vmatpush1.msra.mxu0 0.0
    %1471 = vmatprep.subr.mxu0 0.0
    %1472 = vmatpush1.msra.mxu0 0.0
    %1473 = vmatprep.subr.mxu0 0.0
    %1474 = vmatpush1.msra.mxu0 0.0
    %1475 = vmatprep.subr.mxu0 0.0
    %1476 = vmatpush1.msra.mxu0 0.0
    %1477 = vmatprep.subr.mxu0 0.0
    %1478 = vmatpush1.msra.mxu0 0.0
    %1479 = vmatprep.subr.mxu0 0.0
    %1480 = vmatpush1.msra.mxu0 0.0
    %1481 = vmatprep.subr.mxu0 0.0
    %1482 = vmatpush1.msra.mxu0 0.0
    %1483 = vmatprep.subr.mxu0 0.0
    %1484 = vmatpush1.msra.mxu0 0.0
    %1485 = vmatprep.subr.mxu0 0.0
    %1486 = vmatpush1.msra.mxu0 0.0
    %1487 = vmatprep.subr.mxu0 0.0
    %1488 = vmatpush1.msra.mxu0 %v1435
    %1489 = vmatprep.subr.mxu0 0.0
    %1490 = vmatpush1.msra.mxu0 %v1434
    %1491 = vmatprep.subr.mxu0 0.0
    %1492 = vmatpush2.msra.mxu0 0.0
    %1493 = vmatprep.subr.mxu0 0.0
    %1494 = vmatpush2.msra.mxu0 0.0
    %1495 = vmatprep.subr.mxu0 0.0
    %1496 = vmatpush2.msra.mxu0 0.0
    %1497 = vmatprep.subr.mxu0 0.0
    %1498 = vmatpush2.msra.mxu0 0.0
    %1499 = vmatprep.subr.mxu0 0.0
    %1500 = vmatpush2.msra.mxu0 0.0
    %1501 = vmatprep.subr.mxu0 0.0
    %1502 = vmatpush2.msra.mxu0 0.0
    %1503 = vmatprep.subr.mxu0 0.0
    %1504 = vmatpush2.msra.mxu0 0.0
    %1505 = vmatprep.subr.mxu0 0.0
    %1506 = vmatpush2.msra.mxu0 0.0
    %1507 = vmatprep.subr.mxu0 0.0
    %1508 = vmatpush2.msra.mxu0 0.0
    %1509 = vmatprep.subr.mxu0 0.0
    %1510 = vmatpush2.msra.mxu0 0.0
    %1511 = vmatprep.subr.mxu0 0.0
    %1512 = vmatpush2.msra.mxu0 0.0
    %1513 = vmatprep.subr.mxu0 0.0
    %1514 = vmatpush2.msra.mxu0 0.0
    %1515 = vmatprep.subr.mxu0 0.0
    %1516 = vmatpush2.msra.mxu0 0.0
    %1517 = vmatprep.subr.mxu0 0.0
    %1518 = vmatpush2.msra.mxu0 0.0
    %1519 = vmatprep.subr.mxu0 0.0
    %1520 = vmatpush2.msra.mxu0 0.0
    %1521 = vmatprep.subr.mxu0 0.0
    %1522 = vmatpush2.msra.mxu0 0.0
    %1523 = vmatprep.mubr.f32.mxu0 0.0
    %1524 = vmatmul.mubr.f32.gmra.mxu0 %v1448
    %v1525 = vpop.f32.mrf.mxu0
    %v1526 = vadd.f32 %v1446, %v1525
    %v1527 = vpop.f32.mrf.mxu0
    %1528 = vmatprep.mubr.f32.mxu0 0.0
    %1529 = vmatmul.mubr.f32.gmra.mxu0 %v1451
    %v1530 = vpop.f32.mrf.mxu0
    %v1531 = vadd.f32 %v1446, %v1530
    %v1532 = vpop.f32.mrf.mxu0
    %1533 = vmatprep.mubr.f32.mxu0 0.0
    %1534 = vmatmul.mubr.f32.gmra.mxu0 %v1454
    %v1535 = vpop.f32.mrf.mxu0
    %v1536 = vadd.f32 %v1446, %v1535
    %v1537 = vpop.f32.mrf.mxu0
    %1538 = vmatprep.mubr.f32.mxu0 0.0
    %1539 = vmatmul.mubr.f32.gmra.mxu0 %v1457
    %v1540 = vpop.f32.mrf.mxu0
    %v1541 = vadd.f32 %v1446, %v1540
    %v1542 = vpop.f32.mrf.mxu0
    %1543 = vdwg.mxu0
    %v1544 = vmax.f32 %v1526, 0.0
    %v1545 = vmax.f32 %v1531, 0.0
    %v1546 = vmax.f32 %v1536, 0.0
    %v1547 = vmax.f32 %v1541, 0.0
    %v1548 = vlaneseq
    %v1549 = vshrl.u32 %v1548, 7
    %v1550 = vsub.s32 0, %v1549
    %v1551 = vrot.slane %v1440, %v1550
    %v1553 = vsel %vm267, %v1544, 0
    %v1556 = vsel %vm267, %v1545, 0
    %v1559 = vsel %vm267, %v1546, 0
    %v1562 = vsel %vm267, %v1547, 0
    %1564 = vmatprep.subr.mxu0 0.0
    %1565 = vmatpush1.msra.mxu0 0.0
    %1566 = vmatprep.subr.mxu0 0.0
    %1567 = vmatpush1.msra.mxu0 0.0
    %1568 = vmatprep.subr.mxu0 0.0
    %1569 = vmatpush1.msra.mxu0 0.0
    %1570 = vmatprep.subr.mxu0 0.0
    %1571 = vmatpush1.msra.mxu0 0.0
    %1572 = vmatprep.subr.mxu0 0.0
    %1573 = vmatpush1.msra.mxu0 0.0
    %1574 = vmatprep.subr.mxu0 0.0
    %1575 = vmatpush1.msra.mxu0 0.0
    %1576 = vmatprep.subr.mxu0 0.0
    %1577 = vmatpush1.msra.mxu0 0.0
    %1578 = vmatprep.subr.mxu0 0.0
    %1579 = vmatpush1.msra.mxu0 0.0
    %1580 = vmatprep.subr.mxu0 0.0
    %1581 = vmatpush1.msra.mxu0 0.0
    %1582 = vmatprep.subr.mxu0 0.0
    %1583 = vmatpush1.msra.mxu0 0.0
    %1584 = vmatprep.subr.mxu0 0.0
    %1585 = vmatpush1.msra.mxu0 0.0
    %1586 = vmatprep.subr.mxu0 0.0
    %1587 = vmatpush1.msra.mxu0 0.0
    %1588 = vmatprep.subr.mxu0 0.0
    %1589 = vmatpush1.msra.mxu0 0.0
    %1590 = vmatprep.subr.mxu0 0.0
    %1591 = vmatpush1.msra.mxu0 0.0
    %1592 = vmatprep.subr.mxu0 0.0
    %1593 = vmatpush1.msra.mxu0 %v1438
    %1594 = vmatprep.subr.mxu0 0.0
    %1595 = vmatpush1.msra.mxu0 %v1437
    %1596 = vmatprep.subr.mxu0 0.0
    %1597 = vmatpush2.msra.mxu0 0.0
    %1598 = vmatprep.subr.mxu0 0.0
    %1599 = vmatpush2.msra.mxu0 0.0
    %1600 = vmatprep.subr.mxu0 0.0
    %1601 = vmatpush2.msra.mxu0 0.0
    %1602 = vmatprep.subr.mxu0 0.0
    %1603 = vmatpush2.msra.mxu0 0.0
    %1604 = vmatprep.subr.mxu0 0.0
    %1605 = vmatpush2.msra.mxu0 0.0
    %1606 = vmatprep.subr.mxu0 0.0
    %1607 = vmatpush2.msra.mxu0 0.0
    %1608 = vmatprep.subr.mxu0 0.0
    %1609 = vmatpush2.msra.mxu0 0.0
    %1610 = vmatprep.subr.mxu0 0.0
    %1611 = vmatpush2.msra.mxu0 0.0
    %1612 = vmatprep.subr.mxu0 0.0
    %1613 = vmatpush2.msra.mxu0 0.0
    %1614 = vmatprep.subr.mxu0 0.0
    %1615 = vmatpush2.msra.mxu0 0.0
    %1616 = vmatprep.subr.mxu0 0.0
    %1617 = vmatpush2.msra.mxu0 0.0
    %1618 = vmatprep.subr.mxu0 0.0
    %1619 = vmatpush2.msra.mxu0 0.0
    %1620 = vmatprep.subr.mxu0 0.0
    %1621 = vmatpush2.msra.mxu0 0.0
    %1622 = vmatprep.subr.mxu0 0.0
    %1623 = vmatpush2.msra.mxu0 0.0
    %1624 = vmatprep.subr.mxu0 0.0
    %1625 = vmatpush2.msra.mxu0 0.0
    %1626 = vmatprep.subr.mxu0 0.0
    %1627 = vmatpush2.msra.mxu0 0.0
    %1628 = vmatprep.mubr.f32.mxu0 0.0
    %1629 = vmatmul.mubr.f32.gmra.mxu0 %v1553
    %v1630 = vpop.f32.mrf.mxu0
    %v1631 = vadd.f32 %v1551, %v1630
    %v1632 = vpop.f32.mrf.mxu0
    %1633 = vmatprep.mubr.f32.mxu0 0.0
    %1634 = vmatmul.mubr.f32.gmra.mxu0 %v1556
    %v1635 = vpop.f32.mrf.mxu0
    %v1636 = vadd.f32 %v1551, %v1635
    %v1637 = vpop.f32.mrf.mxu0
    %1638 = vmatprep.mubr.f32.mxu0 0.0
    %1639 = vmatmul.mubr.f32.gmra.mxu0 %v1559
    %v1640 = vpop.f32.mrf.mxu0
    %v1641 = vadd.f32 %v1551, %v1640
    %v1642 = vpop.f32.mrf.mxu0
    %1643 = vmatprep.mubr.f32.mxu0 0.0
    %1644 = vmatmul.mubr.f32.gmra.mxu0 %v1562
    %v1645 = vpop.f32.mrf.mxu0
    %v1646 = vadd.f32 %v1551, %v1645
    %v1647 = vpop.f32.mrf.mxu0
    %1648 = vdwg.mxu0
    %v1649 = vmax.f32 %v1631, 0.0
    %v1650 = vmax.f32 %v1636, 0.0
    %v1651 = vmax.f32 %v1641, 0.0
    %v1652 = vmax.f32 %v1646, 0.0
    %v1653 = vlaneseq
    %v1654 = vshrl.u32 %v1653, 7
    %v1655 = vsub.s32 0, %v1654
    %v1656 = vrot.slane %v1441, %v1655
    %v1657 = vmul.f32 %v1649, %v1656
    %v1658 = vmul.f32 %v1650, %v1656
    %v1659 = vmul.f32 %v1651, %v1656
    %v1660 = vmul.f32 %v1652, %v1656
    %v1661 = vlaneseq
    %v1662 = vshrl.u32 %v1661, 7
    %v1663 = vsub.s32 0, %v1662
    %v1664 = vrot.slane %v1442, %v1663
    %v1665 = vadd.f32 %v1657, %v1664
    %v1666 = vadd.f32 %v1658, %v1664
    %v1667 = vadd.f32 %v1659, %v1664
    %v1668 = vadd.f32 %v1660, %v1664
    %s1669 = scalar_lea.vmem [#allocation2], 144
    %v1670 = vld [vmem:[%s1669] sm:$0xff]
    %v1671 = vld [vmem:[%s1669 + $0x8] sm:$0xff]
    %v1672 = vld [vmem:[%s4 + $0x14] sm:$0x1]
    %v1673 = vlaneseq
    %v1674 = vshrl.u32 %v1673, 7
    %v1675 = vsub.s32 0, %v1674
    %v1676 = vrot.slane %v1672, %v1675
    %v1678 = vsel %vm267, %v1665, 0
    %v1681 = vsel %vm267, %v1666, 0
    %v1684 = vsel %vm267, %v1667, 0
    %v1687 = vsel %vm267, %v1668, 0
    %1689 = vmatprep.subr.mxu0 0.0
    %1690 = vmatpush1.msra.mxu0 0.0
    %1691 = vmatprep.subr.mxu0 0.0
    %1692 = vmatpush1.msra.mxu0 0.0
    %1693 = vmatprep.subr.mxu0 0.0
    %1694 = vmatpush1.msra.mxu0 0.0
    %1695 = vmatprep.subr.mxu0 0.0
    %1696 = vmatpush1.msra.mxu0 0.0
    %1697 = vmatprep.subr.mxu0 0.0
    %1698 = vmatpush1.msra.mxu0 0.0
    %1699 = vmatprep.subr.mxu0 0.0
    %1700 = vmatpush1.msra.mxu0 0.0
    %1701 = vmatprep.subr.mxu0 0.0
    %1702 = vmatpush1.msra.mxu0 0.0
    %1703 = vmatprep.subr.mxu0 0.0
    %1704 = vmatpush1.msra.mxu0 0.0
    %1705 = vmatprep.subr.mxu0 0.0
    %1706 = vmatpush1.msra.mxu0 0.0
    %1707 = vmatprep.subr.mxu0 0.0
    %1708 = vmatpush1.msra.mxu0 0.0
    %1709 = vmatprep.subr.mxu0 0.0
    %1710 = vmatpush1.msra.mxu0 0.0
    %1711 = vmatprep.subr.mxu0 0.0
    %1712 = vmatpush1.msra.mxu0 0.0
    %1713 = vmatprep.subr.mxu0 0.0
    %1714 = vmatpush1.msra.mxu0 0.0
    %1715 = vmatprep.subr.mxu0 0.0
    %1716 = vmatpush1.msra.mxu0 0.0
    %1717 = vmatprep.subr.mxu0 0.0
    %1718 = vmatpush1.msra.mxu0 %v1671
    %1719 = vmatprep.subr.mxu0 0.0
    %1720 = vmatpush1.msra.mxu0 %v1670
    %1721 = vmatprep.subr.mxu0 0.0
    %1722 = vmatpush2.msra.mxu0 0.0
    %1723 = vmatprep.subr.mxu0 0.0
    %1724 = vmatpush2.msra.mxu0 0.0
    %1725 = vmatprep.subr.mxu0 0.0
    %1726 = vmatpush2.msra.mxu0 0.0
    %1727 = vmatprep.subr.mxu0 0.0
    %1728 = vmatpush2.msra.mxu0 0.0
    %1729 = vmatprep.subr.mxu0 0.0
    %1730 = vmatpush2.msra.mxu0 0.0
    %1731 = vmatprep.subr.mxu0 0.0
    %1732 = vmatpush2.msra.mxu0 0.0
    %1733 = vmatprep.subr.mxu0 0.0
    %1734 = vmatpush2.msra.mxu0 0.0
    %1735 = vmatprep.subr.mxu0 0.0
    %1736 = vmatpush2.msra.mxu0 0.0
    %1737 = vmatprep.subr.mxu0 0.0
    %1738 = vmatpush2.msra.mxu0 0.0
    %1739 = vmatprep.subr.mxu0 0.0
    %1740 = vmatpush2.msra.mxu0 0.0
    %1741 = vmatprep.subr.mxu0 0.0
    %1742 = vmatpush2.msra.mxu0 0.0
    %1743 = vmatprep.subr.mxu0 0.0
    %1744 = vmatpush2.msra.mxu0 0.0
    %1745 = vmatprep.subr.mxu0 0.0
    %1746 = vmatpush2.msra.mxu0 0.0
    %1747 = vmatprep.subr.mxu0 0.0
    %1748 = vmatpush2.msra.mxu0 0.0
    %1749 = vmatprep.subr.mxu0 0.0
    %1750 = vmatpush2.msra.mxu0 0.0
    %1751 = vmatprep.subr.mxu0 0.0
    %1752 = vmatpush2.msra.mxu0 0.0
    %1753 = vmatprep.mubr.f32.mxu0 0.0
    %1754 = vmatmul.mubr.f32.gmra.mxu0 %v1678
    %v1755 = vpop.f32.mrf.mxu0
    %v1756 = vadd.f32 %v1676, %v1755
    %v1757 = vpop.f32.mrf.mxu0
    %1758 = vmatprep.mubr.f32.mxu0 0.0
    %1759 = vmatmul.mubr.f32.gmra.mxu0 %v1681
    %v1760 = vpop.f32.mrf.mxu0
    %v1761 = vadd.f32 %v1676, %v1760
    %v1762 = vpop.f32.mrf.mxu0
    %1763 = vmatprep.mubr.f32.mxu0 0.0
    %1764 = vmatmul.mubr.f32.gmra.mxu0 %v1684
    %v1765 = vpop.f32.mrf.mxu0
    %v1766 = vadd.f32 %v1676, %v1765
    %v1767 = vpop.f32.mrf.mxu0
    %1768 = vmatprep.mubr.f32.mxu0 0.0
    %1769 = vmatmul.mubr.f32.gmra.mxu0 %v1687
    %v1770 = vpop.f32.mrf.mxu0
    %v1771 = vadd.f32 %v1676, %v1770
    %v1772 = vpop.f32.mrf.mxu0
    %1773 = vdwg.mxu0
    %v1774 = vmax.f32 %v1756, 0.0
    %v1775 = vmax.f32 %v1761, 0.0
    %v1776 = vmax.f32 %v1766, 0.0
    %v1777 = vmax.f32 %v1771, 0.0
    %v1778 = vld [vmem:[%s5] sm:$0xff]
    %v1779 = vld [vmem:[%s5 + $0x8] sm:$0xff]
    %v1780 = vld [vmem:[%s6] sm:$0x1]
    %v1782 = vlaneseq
    %v1783 = vshrl.u32 %v1782, 7
    %v1784 = vsub.s32 0, %v1783
    %v1785 = vrot.slane %v1780, %v1784
    %v1788 = vsel %vm267, %v1774, 0
    %v1791 = vsel %vm267, %v1775, 0
    %v1794 = vsel %vm267, %v1776, 0
    %v1797 = vsel %vm267, %v1777, 0
    %1799 = vmatprep.subr.mxu0 0.0
    %1800 = vmatpush1.msra.mxu0 0.0
    %1801 = vmatprep.subr.mxu0 0.0
    %1802 = vmatpush1.msra.mxu0 0.0
    %1803 = vmatprep.subr.mxu0 0.0
    %1804 = vmatpush1.msra.mxu0 0.0
    %1805 = vmatprep.subr.mxu0 0.0
    %1806 = vmatpush1.msra.mxu0 0.0
    %1807 = vmatprep.subr.mxu0 0.0
    %1808 = vmatpush1.msra.mxu0 0.0
    %1809 = vmatprep.subr.mxu0 0.0
    %1810 = vmatpush1.msra.mxu0 0.0
    %1811 = vmatprep.subr.mxu0 0.0
    %1812 = vmatpush1.msra.mxu0 0.0
    %1813 = vmatprep.subr.mxu0 0.0
    %1814 = vmatpush1.msra.mxu0 0.0
    %1815 = vmatprep.subr.mxu0 0.0
    %1816 = vmatpush1.msra.mxu0 0.0
    %1817 = vmatprep.subr.mxu0 0.0
    %1818 = vmatpush1.msra.mxu0 0.0
    %1819 = vmatprep.subr.mxu0 0.0
    %1820 = vmatpush1.msra.mxu0 0.0
    %1821 = vmatprep.subr.mxu0 0.0
    %1822 = vmatpush1.msra.mxu0 0.0
    %1823 = vmatprep.subr.mxu0 0.0
    %1824 = vmatpush1.msra.mxu0 0.0
    %1825 = vmatprep.subr.mxu0 0.0
    %1826 = vmatpush1.msra.mxu0 0.0
    %1827 = vmatprep.subr.mxu0 0.0
    %1828 = vmatpush1.msra.mxu0 %v1779
    %1829 = vmatprep.subr.mxu0 0.0
    %1830 = vmatpush1.msra.mxu0 %v1778
    %1831 = vmatprep.subr.mxu0 0.0
    %1832 = vmatpush2.msra.mxu0 0.0
    %1833 = vmatprep.subr.mxu0 0.0
    %1834 = vmatpush2.msra.mxu0 0.0
    %1835 = vmatprep.subr.mxu0 0.0
    %1836 = vmatpush2.msra.mxu0 0.0
    %1837 = vmatprep.subr.mxu0 0.0
    %1838 = vmatpush2.msra.mxu0 0.0
    %1839 = vmatprep.subr.mxu0 0.0
    %1840 = vmatpush2.msra.mxu0 0.0
    %1841 = vmatprep.subr.mxu0 0.0
    %1842 = vmatpush2.msra.mxu0 0.0
    %1843 = vmatprep.subr.mxu0 0.0
    %1844 = vmatpush2.msra.mxu0 0.0
    %1845 = vmatprep.subr.mxu0 0.0
    %1846 = vmatpush2.msra.mxu0 0.0
    %1847 = vmatprep.subr.mxu0 0.0
    %1848 = vmatpush2.msra.mxu0 0.0
    %1849 = vmatprep.subr.mxu0 0.0
    %1850 = vmatpush2.msra.mxu0 0.0
    %1851 = vmatprep.subr.mxu0 0.0
    %1852 = vmatpush2.msra.mxu0 0.0
    %1853 = vmatprep.subr.mxu0 0.0
    %1854 = vmatpush2.msra.mxu0 0.0
    %1855 = vmatprep.subr.mxu0 0.0
    %1856 = vmatpush2.msra.mxu0 0.0
    %1857 = vmatprep.subr.mxu0 0.0
    %1858 = vmatpush2.msra.mxu0 0.0
    %1859 = vmatprep.subr.mxu0 0.0
    %1860 = vmatpush2.msra.mxu0 0.0
    %1861 = vmatprep.subr.mxu0 0.0
    %1862 = vmatpush2.msra.mxu0 0.0
    %1863 = vmatprep.mubr.f32.mxu0 0.0
    %1864 = vmatmul.mubr.f32.gmra.mxu0 %v1788
    %v1865 = vpop.f32.mrf.mxu0
    %v1866 = vadd.f32 %v1785, %v1865
    %v1867 = vpop.f32.mrf.mxu0
    %1868 = vmatprep.mubr.f32.mxu0 0.0
    %1869 = vmatmul.mubr.f32.gmra.mxu0 %v1791
    %v1870 = vpop.f32.mrf.mxu0
    %v1871 = vadd.f32 %v1785, %v1870
    %v1872 = vpop.f32.mrf.mxu0
    %1873 = vmatprep.mubr.f32.mxu0 0.0
    %1874 = vmatmul.mubr.f32.gmra.mxu0 %v1794
    %v1875 = vpop.f32.mrf.mxu0
    %v1876 = vadd.f32 %v1785, %v1875
    %v1877 = vpop.f32.mrf.mxu0
    %1878 = vmatprep.mubr.f32.mxu0 0.0
    %1879 = vmatmul.mubr.f32.gmra.mxu0 %v1797
    %v1880 = vpop.f32.mrf.mxu0
    %v1881 = vadd.f32 %v1785, %v1880
    %v1882 = vpop.f32.mrf.mxu0
    %1883 = vdwg.mxu0
    %vm1884 = vcmask 15360
    %v1885 = vsel %vm1884, %v1866, -inf
    %1886 = vmax.xlane.f32.xlu0 %v1885
    %v1887 = vpop.xlane.xlu0 %1886
    %v1888 = vsel %vm1884, %v1871, -inf
    %1889 = vmax.xlane.f32.xlu0 %v1888
    %v1890 = vpop.xlane.xlu0 %1889
    %v1891 = vsel %vm1884, %v1876, -inf
    %1892 = vmax.xlane.f32.xlu0 %v1891
    %v1893 = vpop.xlane.xlu0 %1892
    %v1894 = vsel %vm1884, %v1881, -inf
    %1895 = vmax.xlane.f32.xlu0 %v1894
    %v1896 = vpop.xlane.xlu0 %1895
    %v1897 = vsub.f32 %v1866, %v1887
    %v1898 = vsub.f32 %v1871, %v1890
    %v1899 = vsub.f32 %v1876, %v1893
    %v1900 = vsub.f32 %v1881, %v1896
    %v1901 = vmul.f32 %v1897, 1.442695
    %v1902 = vpow.pop %v1901
    %v1903 = vmul.f32 %v1898, 1.442695
    %v1904 = vpow.pop %v1903
    %v1905 = vmul.f32 %v1899, 1.442695
    %v1906 = vpow.pop %v1905
    %v1907 = vmul.f32 %v1900, 1.442695
    %v1908 = vpow.pop %v1907
    %v1909 = vsel %vm1884, %v1902, 0.0
    %1910 = vadd.xlane.f32.xlu0 %v1909
    %v1911 = vpop.xlane.xlu0 %1910
    %v1912 = vsel %vm1884, %v1904, 0.0
    %1913 = vadd.xlane.f32.xlu0 %v1912
    %v1914 = vpop.xlane.xlu0 %1913
    %v1915 = vsel %vm1884, %v1906, 0.0
    %1916 = vadd.xlane.f32.xlu0 %v1915
    %v1917 = vpop.xlane.xlu0 %1916
    %v1918 = vsel %vm1884, %v1908, 0.0
    %1919 = vadd.xlane.f32.xlu0 %v1918
    %v1920 = vpop.xlane.xlu0 %1919
    %v1921 = vlog2.pop %v1911
    %v1922 = vmul.f32 %v1921, 0.6931472
    %v1923 = vlog2.pop %v1914
    %v1924 = vmul.f32 %v1923, 0.6931472
    %v1925 = vlog2.pop %v1917
    %v1926 = vmul.f32 %v1925, 0.6931472
    %v1927 = vlog2.pop %v1920
    %v1928 = vmul.f32 %v1927, 0.6931472
    %v1929 = vsub.f32 %v1897, %v1922
    %v1930 = vsub.f32 %v1898, %v1924
    %v1931 = vsub.f32 %v1899, %v1926
    %v1932 = vsub.f32 %v1900, %v1928
    %1933 = vst.msk [vmem:[%s7] sm:$0xff] %vm1884, %v1929
    %1934 = vst.msk [vmem:[%s7 + $0x8] sm:$0xff] %vm1884, %v1930
    %1935 = vst.msk [vmem:[%s7 + $0x10] sm:$0xff] %vm1884, %v1931
    %1936 = vst.msk [vmem:[%s7 + $0x18] sm:$0xff] %vm1884, %v1932
    // Predicated region
    $region34: #{tpu_custom_call.1} parent=1 // pred_check
      _
    $region35: #{tpu_custom_call.1} parent=1 // pred_check_branch
      %1938 = sbr.rel (0) target = $region37
    $region36: #{tpu_custom_call.1} parent=1 // pred_region
      _
    $region37: #{tpu_custom_call.1} parent=1 // pred_fallthru
      _
    // Predicated region
    $region38: #{tpu_custom_call.1} parent=1 // pred_check
      _
    $region39: #{tpu_custom_call.1} parent=1 // pred_check_branch
      %1940 = sbr.rel (0) target = $region41
    $region40: #{tpu_custom_call.1} parent=1 // pred_region
      _
    $region41: #{tpu_custom_call.1} parent=1 // pred_fallthru
      _
    %1941 = vsyncpa [#allocation3], 1

</llo_original>
